<compile_context>
chip_gen: v6e
topology: v6e:2x2x1
jax: 0.10.0
libtpu: 0.0.40
codegen_flags: <defaults>
</compile_context>

<pallas_src>
import functools

import jax
import jax.numpy as jnp
from jax.experimental import pallas as pl
from jax.experimental.pallas import tpu as pltpu

EPS = 1e-5

# Small robustness shims across jax versions.
_CompilerParams = getattr(pltpu, "CompilerParams", None) or getattr(
    pltpu, "TPUCompilerParams", None)


def _reciprocal(x):
    if hasattr(pl, "reciprocal"):
        return pl.reciprocal(x, approx=False)   # exact; keeps 1e-4 tolerance
    return 1.0 / x


def _layernorm(x, gamma, beta):
    mean = jnp.mean(x, axis=-1, keepdims=True)
    var = jnp.mean((x - mean) ** 2, axis=-1, keepdims=True)
    return (x - mean) * jax.lax.rsqrt(var + EPS) * gamma + beta


# ----------------------------- fused kernel ----------------------------------


def vit_block_kernel(x_ref, g1_ref, be1_ref,
                     wq_ref, bq_ref, wk_ref, bk_ref, wv_ref, bv_ref,
                     wfc_ref, bfc_ref,
                     g2_ref, be2_ref, w1_ref, bf1_ref, w2_ref, bf2_ref,
                     o_ref, *, head, scale):
    """Whole VIT block for one batch element: everything stays in VMEM/vregs."""
    x = x_ref[...].astype(jnp.float32)                       # (N, C)
    N, C = x.shape
    hs = C // head            # head_size
    nb = C // hs              # channel blocks per token (== head)
    tph = N // head           # tokens covered by each head in the raw .view split

    # ---- LayerNorm 1 + QKV projections ----
    xn = _layernorm(x, g1_ref[...], be1_ref[...])
    q = jnp.dot(xn, wq_ref[...], preferred_element_type=jnp.float32) + bq_ref[...]
    k = jnp.dot(xn, wk_ref[...], preferred_element_type=jnp.float32) + bk_ref[...]
    v = jnp.dot(xn, wv_ref[...], preferred_element_type=jnp.float32) + bv_ref[...]

    # ---- multi-head attention, reproducing the raw row-major .view head split ----
    # Row i = j*tph + a of head_view(t, h) equals view-row m = a*nb + j of the
    # PyTorch (head, N, hs) view; the permutation is identical for Q, K, V so the
    # softmax-attention output only needs the inverse permutation on write-back.
    def head_view(t, h):
        blk = t[h * tph:(h + 1) * tph, :]                    # (tph, C), static slice
        return jnp.concatenate(
            [blk[:, j * hs:(j + 1) * hs] for j in range(nb)], axis=0)   # (N, hs)

    o_blocks = []
    for h in range(head):                                    # statically unrolled
        qh = head_view(q, h)
        kh = head_view(k, h)
        vh = head_view(v, h)
        s = jax.lax.dot_general(qh, kh, (((1,), (1,)), ((), ())),
                                preferred_element_type=jnp.float32) * scale
        s = s - jnp.max(s, axis=-1, keepdims=True)
        p = jnp.exp(s)
        p = p * _reciprocal(jnp.sum(p, axis=-1, keepdims=True))
        oh = jnp.dot(p, vh, preferred_element_type=jnp.float32)         # (N, hs)
        # inverse permutation: token a of this head gets channel block j from
        # row j*tph + a  ->  (tph, C) block for tokens [h*tph, (h+1)*tph)
        o_blocks.append(jnp.concatenate(
            [oh[j * tph:(j + 1) * tph, :] for j in range(nb)], axis=1))
    attn = jnp.concatenate(o_blocks, axis=0)                 # (N, C)

    # ---- attention output projection + residual ----
    hres = x + jnp.dot(attn, wfc_ref[...], preferred_element_type=jnp.float32) + bfc_ref[...]

    # ---- LayerNorm 2 + GELU MLP + residual ----
    xn2 = _layernorm(hres, g2_ref[...], be2_ref[...])
    f = jnp.dot(xn2, w1_ref[...], preferred_element_type=jnp.float32) + bf1_ref[...]
    f = 0.5 * f * (1.0 + jax.lax.erf(f * jnp.float32(0.7071067811865476)))  # exact GELU
    f = jnp.dot(f, w2_ref[...], preferred_element_type=jnp.float32) + bf2_ref[...]
    o_ref[...] = hres + f


# ----------------------------- wrapper ---------------------------------------


def vit_block(x, params, head):
    B, N, C = x.shape
    hs = C // head
    scale = hs ** (-0.5)          # qk_scale=0.0 is falsy in the PyTorch ctor
    # The raw .view head split only stays token-aligned when N % head == 0.
    assert C % head == 0 and N % head == 0, "kernel assumes N and C divisible by head"

    weight_args = (params['g1'], params['b1'],
                   params['wqT'], params['bq'],
                   params['wkT'], params['bk'],
                   params['wvT'], params['bv'],
                   params['wfcT'], params['bfc'],
                   params['g2'], params['b2'],
                   params['w1T'], params['bf1'],
                   params['w2T'], params['bf2'])

    tok_spec = pl.BlockSpec((None, N, C), lambda b: (b, 0, 0))

    def rep_spec(a):
        nd = a.ndim
        return pl.BlockSpec(a.shape, lambda b, _nd=nd: (0,) * _nd)

    return pl.pallas_call(
        functools.partial(vit_block_kernel, head=head, scale=scale),
        out_shape=jax.ShapeDtypeStruct((B, N, C), jnp.float32),
        grid=(B,),
        in_specs=[tok_spec] + [rep_spec(a) for a in weight_args],
        out_specs=pl.BlockSpec((None, N, C), lambda b: (b, 0, 0)),
        compiler_params=_CompilerParams(dimension_semantics=("parallel",)),
    )(x, *weight_args)


# ----------------------------- reference (pure JAX) ---------------------------


def vit_block_ref(x, params, head):
    B, N, C = x.shape
    hs = C // head
    scale = hs ** (-0.5)

    def ln(z, g, b):
        m = jnp.mean(z, -1, keepdims=True)
        v = jnp.mean((z - m) ** 2, -1, keepdims=True)
        return (z - m) / jnp.sqrt(v + EPS) * g + b

    xn = ln(x, params['g1'], params['b1'])
    q = (xn @ params['wqT'] + params['bq']).reshape(B, head, N, hs)
    k = (xn @ params['wkT'] + params['bk']).reshape(B, head, N, hs)
    v = (xn @ params['wvT'] + params['bv']).reshape(B, head, N, hs)
    att = jax.nn.softmax(jnp.einsum('bhnd,bhmd->bhnm', q, k) * scale, axis=-1)
    o = jnp.einsum('bhnm,bhmd->bhnd', att, v).reshape(B, N, C)
    h = x + (o @ params['wfcT'] + params['bfc'])
    xn2 = ln(h, params['g2'], params['b2'])
    f = xn2 @ params['w1T'] + params['bf1']
    f = 0.5 * f * (1.0 + jax.lax.erf(f / jnp.sqrt(2.0)))
    f = f @ params['w2T'] + params['bf2']
    return h + f


# ----------------------------- main -------------------------------------------


if __name__ == "__main__":
    # Module hyper-parameters (small, consistent with the forward pass):
    #   embedding_size = input_size = output_size = 32, head = 4,
    #   FFN hidden_size = 64, seq N = 8, batch B = 2, dropout = 0.0 (eval mode).
    B, N, C = 2, 8, 32
    head = 4
    H_FFN = 64

    key = jax.random.PRNGKey(0)
    ks = jax.random.split(key, 16)

    def w(k, shape, s=0.05):
        return jax.random.normal(k, shape, jnp.float32) * s

    params = {
        # LayerNorm 1 / 2  (stored as (1, C) for TPU-friendly 2-D layout)
        'g1': jnp.ones((1, C), jnp.float32),
        'b1': jnp.zeros((1, C), jnp.float32),
        'g2': jnp.ones((1, C), jnp.float32),
        'b2': jnp.zeros((1, C), jnp.float32),
        # Attention QKV linears: PyTorch weight is (out,in); we pass W^T = (in,out)
        'wqT': w(ks[0], (C, C)), 'bq': w(ks[1], (1, C)),
        'wkT': w(ks[2], (C, C)), 'bk': w(ks[3], (1, C)),
        'wvT': w(ks[4], (C, C)), 'bv': w(ks[5], (1, C)),
        # Attention output projection fc
        'wfcT': w(ks[6], (C, C)), 'bfc': w(ks[7], (1, C)),
        # FFN: fc1 (input_size -> hidden), fc2 (hidden -> output_size)
        'w1T': w(ks[8], (C, H_FFN)), 'bf1': w(ks[9], (1, H_FFN)),
        'w2T': w(ks[10], (H_FFN, C)), 'bf2': w(ks[11], (1, C)),
    }

    x = jax.random.normal(ks[12], (B, N, C), jnp.float32)

    out = jax.block_until_ready(vit_block(x, params, head))
    ref = vit_block_ref(x, params, head)

    assert out.shape == (B, N, C)
    assert jnp.allclose(out, ref, atol=1e-4, rtol=1e-4), "mismatch vs JAX reference"
    print("KERNEL_OK")
</pallas_src>

<mosaic_0001>
module attributes {stable_mosaic.version = 11 : i64} {
  func.func @vit_block_kernel(%arg0: i32, %arg1: memref<1x8x32xf32, #tpu.memory_space<vmem>>, %arg2: memref<1x32xf32, #tpu.memory_space<vmem>>, %arg3: memref<1x32xf32, #tpu.memory_space<vmem>>, %arg4: memref<32x32xf32, #tpu.memory_space<vmem>>, %arg5: memref<1x32xf32, #tpu.memory_space<vmem>>, %arg6: memref<32x32xf32, #tpu.memory_space<vmem>>, %arg7: memref<1x32xf32, #tpu.memory_space<vmem>>, %arg8: memref<32x32xf32, #tpu.memory_space<vmem>>, %arg9: memref<1x32xf32, #tpu.memory_space<vmem>>, %arg10: memref<32x32xf32, #tpu.memory_space<vmem>>, %arg11: memref<1x32xf32, #tpu.memory_space<vmem>>, %arg12: memref<1x32xf32, #tpu.memory_space<vmem>>, %arg13: memref<1x32xf32, #tpu.memory_space<vmem>>, %arg14: memref<32x64xf32, #tpu.memory_space<vmem>>, %arg15: memref<1x64xf32, #tpu.memory_space<vmem>>, %arg16: memref<64x32xf32, #tpu.memory_space<vmem>>, %arg17: memref<1x32xf32, #tpu.memory_space<vmem>>, %arg18: memref<1x8x32xf32, #tpu.memory_space<vmem>>) attributes {dimension_semantics = [#tpu.dimension_semantics<parallel>], iteration_bounds = array<i64: 2>, scalar_prefetch = 0 : i64, scratch_operands = 0 : i64, tpu.core_type = #tpu.core_type<tc>, window_params = [{transform_indices = @transform_0, window_bounds = array<i64: 1, 8, 32>}, {pipeline_mode = #tpu.pipeline_mode<synchronous>, transform_indices = @transform_1, window_bounds = array<i64: 1, 32>}, {pipeline_mode = #tpu.pipeline_mode<synchronous>, transform_indices = @transform_2, window_bounds = array<i64: 1, 32>}, {pipeline_mode = #tpu.pipeline_mode<synchronous>, transform_indices = @transform_3, window_bounds = array<i64: 32, 32>}, {pipeline_mode = #tpu.pipeline_mode<synchronous>, transform_indices = @transform_4, window_bounds = array<i64: 1, 32>}, {pipeline_mode = #tpu.pipeline_mode<synchronous>, transform_indices = @transform_5, window_bounds = array<i64: 32, 32>}, {pipeline_mode = #tpu.pipeline_mode<synchronous>, transform_indices = @transform_6, window_bounds = array<i64: 1, 32>}, {pipeline_mode = #tpu.pipeline_mode<synchronous>, transform_indices = @transform_7, window_bounds = array<i64: 32, 32>}, {pipeline_mode = #tpu.pipeline_mode<synchronous>, transform_indices = @transform_8, window_bounds = array<i64: 1, 32>}, {pipeline_mode = #tpu.pipeline_mode<synchronous>, transform_indices = @transform_9, window_bounds = array<i64: 32, 32>}, {pipeline_mode = #tpu.pipeline_mode<synchronous>, transform_indices = @transform_10, window_bounds = array<i64: 1, 32>}, {pipeline_mode = #tpu.pipeline_mode<synchronous>, transform_indices = @transform_11, window_bounds = array<i64: 1, 32>}, {pipeline_mode = #tpu.pipeline_mode<synchronous>, transform_indices = @transform_12, window_bounds = array<i64: 1, 32>}, {pipeline_mode = #tpu.pipeline_mode<synchronous>, transform_indices = @transform_13, window_bounds = array<i64: 32, 64>}, {pipeline_mode = #tpu.pipeline_mode<synchronous>, transform_indices = @transform_14, window_bounds = array<i64: 1, 64>}, {pipeline_mode = #tpu.pipeline_mode<synchronous>, transform_indices = @transform_15, window_bounds = array<i64: 64, 32>}, {pipeline_mode = #tpu.pipeline_mode<synchronous>, transform_indices = @transform_16, window_bounds = array<i64: 1, 32>}, {transform_indices = @transform_17, window_bounds = array<i64: 1, 8, 32>}]} {
    %c0 = arith.constant 0 : index
    %c0_0 = arith.constant 0 : index
    %c0_1 = arith.constant 0 : index
    %0 = vector.load %arg1[%c0, %c0_0, %c0_1] : memref<1x8x32xf32, #tpu.memory_space<vmem>>, vector<1x8x32xf32>
    %1 = vector.shape_cast %0 : vector<1x8x32xf32> to vector<8x32xf32>
    %c0_2 = arith.constant 0 : index
    %c0_3 = arith.constant 0 : index
    %2 = vector.load %arg2[%c0_2, %c0_3] : memref<1x32xf32, #tpu.memory_space<vmem>>, vector<1x32xf32>
    %c0_4 = arith.constant 0 : index
    %c0_5 = arith.constant 0 : index
    %3 = vector.load %arg3[%c0_4, %c0_5] : memref<1x32xf32, #tpu.memory_space<vmem>>, vector<1x32xf32>
    %cst = arith.constant dense<0.000000e+00> : vector<8xf32>
    %4 = vector.multi_reduction <add>, %1, %cst [1] : vector<8x32xf32> to vector<8xf32>
    %5 = vector.shape_cast %4 : vector<8xf32> to vector<8x1xf32>
    %cst_6 = arith.constant 3.200000e+01 : f32
    %6 = vector.broadcast %cst_6 : f32 to vector<8x1xf32>
    %7 = arith.divf %5, %6 : vector<8x1xf32>
    %8 = vector.broadcast %7 : vector<8x1xf32> to vector<8x32xf32>
    %9 = arith.subf %1, %8 : vector<8x32xf32>
    %10 = arith.mulf %9, %9 : vector<8x32xf32>
    %cst_7 = arith.constant dense<0.000000e+00> : vector<8xf32>
    %11 = vector.multi_reduction <add>, %10, %cst_7 [1] : vector<8x32xf32> to vector<8xf32>
    %12 = vector.shape_cast %11 : vector<8xf32> to vector<8x1xf32>
    %cst_8 = arith.constant 3.200000e+01 : f32
    %13 = vector.broadcast %cst_8 : f32 to vector<8x1xf32>
    %14 = arith.divf %12, %13 : vector<8x1xf32>
    %15 = vector.broadcast %7 : vector<8x1xf32> to vector<8x32xf32>
    %16 = arith.subf %1, %15 : vector<8x32xf32>
    %cst_9 = arith.constant 9.99999974E-6 : f32
    %17 = vector.broadcast %cst_9 : f32 to vector<8x1xf32>
    %18 = arith.addf %14, %17 : vector<8x1xf32>
    %19 = math.rsqrt %18 : vector<8x1xf32>
    %20 = vector.broadcast %19 : vector<8x1xf32> to vector<8x32xf32>
    %21 = arith.mulf %16, %20 : vector<8x32xf32>
    %22 = vector.broadcast %2 : vector<1x32xf32> to vector<8x32xf32>
    %23 = arith.mulf %21, %22 : vector<8x32xf32>
    %24 = vector.broadcast %3 : vector<1x32xf32> to vector<8x32xf32>
    %25 = arith.addf %23, %24 : vector<8x32xf32>
    %c0_10 = arith.constant 0 : index
    %c0_11 = arith.constant 0 : index
    %26 = vector.load %arg4[%c0_10, %c0_11] : memref<32x32xf32, #tpu.memory_space<vmem>>, vector<32x32xf32>
    %cst_12 = arith.constant dense<0.000000e+00> : vector<8x32xf32>
    %27 = tpu.matmul %25, %26, %cst_12 {dimension_numbers = #tpu.dot_dimension_numbers<[1], [0], [0], [1], [0, 0, 1, 1], [], []>} : vector<8x32xf32>, vector<32x32xf32>, vector<8x32xf32> -> vector<8x32xf32>
    %c0_13 = arith.constant 0 : index
    %c0_14 = arith.constant 0 : index
    %28 = vector.load %arg5[%c0_13, %c0_14] : memref<1x32xf32, #tpu.memory_space<vmem>>, vector<1x32xf32>
    %29 = vector.broadcast %28 : vector<1x32xf32> to vector<8x32xf32>
    %30 = arith.addf %27, %29 : vector<8x32xf32>
    %c0_15 = arith.constant 0 : index
    %c0_16 = arith.constant 0 : index
    %31 = vector.load %arg6[%c0_15, %c0_16] : memref<32x32xf32, #tpu.memory_space<vmem>>, vector<32x32xf32>
    %cst_17 = arith.constant dense<0.000000e+00> : vector<8x32xf32>
    %32 = tpu.matmul %25, %31, %cst_17 {dimension_numbers = #tpu.dot_dimension_numbers<[1], [0], [0], [1], [0, 0, 1, 1], [], []>} : vector<8x32xf32>, vector<32x32xf32>, vector<8x32xf32> -> vector<8x32xf32>
    %c0_18 = arith.constant 0 : index
    %c0_19 = arith.constant 0 : index
    %33 = vector.load %arg7[%c0_18, %c0_19] : memref<1x32xf32, #tpu.memory_space<vmem>>, vector<1x32xf32>
    %34 = vector.broadcast %33 : vector<1x32xf32> to vector<8x32xf32>
    %35 = arith.addf %32, %34 : vector<8x32xf32>
    %c0_20 = arith.constant 0 : index
    %c0_21 = arith.constant 0 : index
    %36 = vector.load %arg8[%c0_20, %c0_21] : memref<32x32xf32, #tpu.memory_space<vmem>>, vector<32x32xf32>
    %cst_22 = arith.constant dense<0.000000e+00> : vector<8x32xf32>
    %37 = tpu.matmul %25, %36, %cst_22 {dimension_numbers = #tpu.dot_dimension_numbers<[1], [0], [0], [1], [0, 0, 1, 1], [], []>} : vector<8x32xf32>, vector<32x32xf32>, vector<8x32xf32> -> vector<8x32xf32>
    %c0_23 = arith.constant 0 : index
    %c0_24 = arith.constant 0 : index
    %38 = vector.load %arg9[%c0_23, %c0_24] : memref<1x32xf32, #tpu.memory_space<vmem>>, vector<1x32xf32>
    %39 = vector.broadcast %38 : vector<1x32xf32> to vector<8x32xf32>
    %40 = arith.addf %37, %39 : vector<8x32xf32>
    %41 = vector.extract_strided_slice %30 {offsets = [0, 0], sizes = [2, 32], strides = [1, 1]} : vector<8x32xf32> to vector<2x32xf32>
    %42 = vector.extract_strided_slice %41 {offsets = [0, 0], sizes = [2, 8], strides = [1, 1]} : vector<2x32xf32> to vector<2x8xf32>
    %43 = vector.extract_strided_slice %41 {offsets = [0, 8], sizes = [2, 8], strides = [1, 1]} : vector<2x32xf32> to vector<2x8xf32>
    %44 = vector.extract_strided_slice %41 {offsets = [0, 16], sizes = [2, 8], strides = [1, 1]} : vector<2x32xf32> to vector<2x8xf32>
    %45 = vector.extract_strided_slice %41 {offsets = [0, 24], sizes = [2, 8], strides = [1, 1]} : vector<2x32xf32> to vector<2x8xf32>
    %46 = tpu.concatenate %42, %43, %44, %45 in 0 : vector<2x8xf32>, vector<2x8xf32>, vector<2x8xf32>, vector<2x8xf32> -> vector<8x8xf32>
    %47 = vector.extract_strided_slice %35 {offsets = [0, 0], sizes = [2, 32], strides = [1, 1]} : vector<8x32xf32> to vector<2x32xf32>
    %48 = vector.extract_strided_slice %47 {offsets = [0, 0], sizes = [2, 8], strides = [1, 1]} : vector<2x32xf32> to vector<2x8xf32>
    %49 = vector.extract_strided_slice %47 {offsets = [0, 8], sizes = [2, 8], strides = [1, 1]} : vector<2x32xf32> to vector<2x8xf32>
    %50 = vector.extract_strided_slice %47 {offsets = [0, 16], sizes = [2, 8], strides = [1, 1]} : vector<2x32xf32> to vector<2x8xf32>
    %51 = vector.extract_strided_slice %47 {offsets = [0, 24], sizes = [2, 8], strides = [1, 1]} : vector<2x32xf32> to vector<2x8xf32>
    %52 = tpu.concatenate %48, %49, %50, %51 in 0 : vector<2x8xf32>, vector<2x8xf32>, vector<2x8xf32>, vector<2x8xf32> -> vector<8x8xf32>
    %53 = vector.extract_strided_slice %40 {offsets = [0, 0], sizes = [2, 32], strides = [1, 1]} : vector<8x32xf32> to vector<2x32xf32>
    %54 = vector.extract_strided_slice %53 {offsets = [0, 0], sizes = [2, 8], strides = [1, 1]} : vector<2x32xf32> to vector<2x8xf32>
    %55 = vector.extract_strided_slice %53 {offsets = [0, 8], sizes = [2, 8], strides = [1, 1]} : vector<2x32xf32> to vector<2x8xf32>
    %56 = vector.extract_strided_slice %53 {offsets = [0, 16], sizes = [2, 8], strides = [1, 1]} : vector<2x32xf32> to vector<2x8xf32>
    %57 = vector.extract_strided_slice %53 {offsets = [0, 24], sizes = [2, 8], strides = [1, 1]} : vector<2x32xf32> to vector<2x8xf32>
    %58 = tpu.concatenate %54, %55, %56, %57 in 0 : vector<2x8xf32>, vector<2x8xf32>, vector<2x8xf32>, vector<2x8xf32> -> vector<8x8xf32>
    %cst_25 = arith.constant dense<0.000000e+00> : vector<8x8xf32>
    %59 = tpu.matmul %46, %52, %cst_25 {dimension_numbers = #tpu.dot_dimension_numbers<[1], [1], [0], [0], [0, 0, 1, 0], [], []>} : vector<8x8xf32>, vector<8x8xf32>, vector<8x8xf32> -> vector<8x8xf32>
    %cst_26 = arith.constant 0.353553385 : f32
    %60 = vector.broadcast %cst_26 : f32 to vector<8x8xf32>
    %61 = arith.mulf %59, %60 : vector<8x8xf32>
    %cst_27 = arith.constant dense<0xFF800000> : vector<8xf32>
    %62 = vector.multi_reduction <maximumf>, %61, %cst_27 [1] : vector<8x8xf32> to vector<8xf32>
    %63 = vector.shape_cast %62 : vector<8xf32> to vector<8x1xf32>
    %64 = vector.broadcast %63 : vector<8x1xf32> to vector<8x8xf32>
    %65 = arith.subf %61, %64 : vector<8x8xf32>
    %66 = math.exp %65 : vector<8x8xf32>
    %cst_28 = arith.constant dense<0.000000e+00> : vector<8xf32>
    %67 = vector.multi_reduction <add>, %66, %cst_28 [1] : vector<8x8xf32> to vector<8xf32>
    %68 = vector.shape_cast %67 : vector<8xf32> to vector<8x1xf32>
    %69 = tpu.reciprocal %68 : vector<8x1xf32> -> vector<8x1xf32>
    %70 = vector.broadcast %69 : vector<8x1xf32> to vector<8x8xf32>
    %71 = arith.mulf %66, %70 : vector<8x8xf32>
    %cst_29 = arith.constant dense<0.000000e+00> : vector<8x8xf32>
    %72 = tpu.matmul %71, %58, %cst_29 {dimension_numbers = #tpu.dot_dimension_numbers<[1], [0], [0], [1], [0, 0, 1, 1], [], []>} : vector<8x8xf32>, vector<8x8xf32>, vector<8x8xf32> -> vector<8x8xf32>
    %73 = vector.extract_strided_slice %72 {offsets = [0, 0], sizes = [2, 8], strides = [1, 1]} : vector<8x8xf32> to vector<2x8xf32>
    %74 = vector.extract_strided_slice %72 {offsets = [2, 0], sizes = [2, 8], strides = [1, 1]} : vector<8x8xf32> to vector<2x8xf32>
    %75 = vector.extract_strided_slice %72 {offsets = [4, 0], sizes = [2, 8], strides = [1, 1]} : vector<8x8xf32> to vector<2x8xf32>
    %76 = vector.extract_strided_slice %72 {offsets = [6, 0], sizes = [2, 8], strides = [1, 1]} : vector<8x8xf32> to vector<2x8xf32>
    %77 = tpu.concatenate %73, %74, %75, %76 in 1 : vector<2x8xf32>, vector<2x8xf32>, vector<2x8xf32>, vector<2x8xf32> -> vector<2x32xf32>
    %78 = vector.extract_strided_slice %30 {offsets = [2, 0], sizes = [2, 32], strides = [1, 1]} : vector<8x32xf32> to vector<2x32xf32>
    %79 = vector.extract_strided_slice %78 {offsets = [0, 0], sizes = [2, 8], strides = [1, 1]} : vector<2x32xf32> to vector<2x8xf32>
    %80 = vector.extract_strided_slice %78 {offsets = [0, 8], sizes = [2, 8], strides = [1, 1]} : vector<2x32xf32> to vector<2x8xf32>
    %81 = vector.extract_strided_slice %78 {offsets = [0, 16], sizes = [2, 8], strides = [1, 1]} : vector<2x32xf32> to vector<2x8xf32>
    %82 = vector.extract_strided_slice %78 {offsets = [0, 24], sizes = [2, 8], strides = [1, 1]} : vector<2x32xf32> to vector<2x8xf32>
    %83 = tpu.concatenate %79, %80, %81, %82 in 0 : vector<2x8xf32>, vector<2x8xf32>, vector<2x8xf32>, vector<2x8xf32> -> vector<8x8xf32>
    %84 = vector.extract_strided_slice %35 {offsets = [2, 0], sizes = [2, 32], strides = [1, 1]} : vector<8x32xf32> to vector<2x32xf32>
    %85 = vector.extract_strided_slice %84 {offsets = [0, 0], sizes = [2, 8], strides = [1, 1]} : vector<2x32xf32> to vector<2x8xf32>
    %86 = vector.extract_strided_slice %84 {offsets = [0, 8], sizes = [2, 8], strides = [1, 1]} : vector<2x32xf32> to vector<2x8xf32>
    %87 = vector.extract_strided_slice %84 {offsets = [0, 16], sizes = [2, 8], strides = [1, 1]} : vector<2x32xf32> to vector<2x8xf32>
    %88 = vector.extract_strided_slice %84 {offsets = [0, 24], sizes = [2, 8], strides = [1, 1]} : vector<2x32xf32> to vector<2x8xf32>
    %89 = tpu.concatenate %85, %86, %87, %88 in 0 : vector<2x8xf32>, vector<2x8xf32>, vector<2x8xf32>, vector<2x8xf32> -> vector<8x8xf32>
    %90 = vector.extract_strided_slice %40 {offsets = [2, 0], sizes = [2, 32], strides = [1, 1]} : vector<8x32xf32> to vector<2x32xf32>
    %91 = vector.extract_strided_slice %90 {offsets = [0, 0], sizes = [2, 8], strides = [1, 1]} : vector<2x32xf32> to vector<2x8xf32>
    %92 = vector.extract_strided_slice %90 {offsets = [0, 8], sizes = [2, 8], strides = [1, 1]} : vector<2x32xf32> to vector<2x8xf32>
    %93 = vector.extract_strided_slice %90 {offsets = [0, 16], sizes = [2, 8], strides = [1, 1]} : vector<2x32xf32> to vector<2x8xf32>
    %94 = vector.extract_strided_slice %90 {offsets = [0, 24], sizes = [2, 8], strides = [1, 1]} : vector<2x32xf32> to vector<2x8xf32>
    %95 = tpu.concatenate %91, %92, %93, %94 in 0 : vector<2x8xf32>, vector<2x8xf32>, vector<2x8xf32>, vector<2x8xf32> -> vector<8x8xf32>
    %cst_30 = arith.constant dense<0.000000e+00> : vector<8x8xf32>
    %96 = tpu.matmul %83, %89, %cst_30 {dimension_numbers = #tpu.dot_dimension_numbers<[1], [1], [0], [0], [0, 0, 1, 0], [], []>} : vector<8x8xf32>, vector<8x8xf32>, vector<8x8xf32> -> vector<8x8xf32>
    %cst_31 = arith.constant 0.353553385 : f32
    %97 = vector.broadcast %cst_31 : f32 to vector<8x8xf32>
    %98 = arith.mulf %96, %97 : vector<8x8xf32>
    %cst_32 = arith.constant dense<0xFF800000> : vector<8xf32>
    %99 = vector.multi_reduction <maximumf>, %98, %cst_32 [1] : vector<8x8xf32> to vector<8xf32>
    %100 = vector.shape_cast %99 : vector<8xf32> to vector<8x1xf32>
    %101 = vector.broadcast %100 : vector<8x1xf32> to vector<8x8xf32>
    %102 = arith.subf %98, %101 : vector<8x8xf32>
    %103 = math.exp %102 : vector<8x8xf32>
    %cst_33 = arith.constant dense<0.000000e+00> : vector<8xf32>
    %104 = vector.multi_reduction <add>, %103, %cst_33 [1] : vector<8x8xf32> to vector<8xf32>
    %105 = vector.shape_cast %104 : vector<8xf32> to vector<8x1xf32>
    %106 = tpu.reciprocal %105 : vector<8x1xf32> -> vector<8x1xf32>
    %107 = vector.broadcast %106 : vector<8x1xf32> to vector<8x8xf32>
    %108 = arith.mulf %103, %107 : vector<8x8xf32>
    %cst_34 = arith.constant dense<0.000000e+00> : vector<8x8xf32>
    %109 = tpu.matmul %108, %95, %cst_34 {dimension_numbers = #tpu.dot_dimension_numbers<[1], [0], [0], [1], [0, 0, 1, 1], [], []>} : vector<8x8xf32>, vector<8x8xf32>, vector<8x8xf32> -> vector<8x8xf32>
    %110 = vector.extract_strided_slice %109 {offsets = [0, 0], sizes = [2, 8], strides = [1, 1]} : vector<8x8xf32> to vector<2x8xf32>
    %111 = vector.extract_strided_slice %109 {offsets = [2, 0], sizes = [2, 8], strides = [1, 1]} : vector<8x8xf32> to vector<2x8xf32>
    %112 = vector.extract_strided_slice %109 {offsets = [4, 0], sizes = [2, 8], strides = [1, 1]} : vector<8x8xf32> to vector<2x8xf32>
    %113 = vector.extract_strided_slice %109 {offsets = [6, 0], sizes = [2, 8], strides = [1, 1]} : vector<8x8xf32> to vector<2x8xf32>
    %114 = tpu.concatenate %110, %111, %112, %113 in 1 : vector<2x8xf32>, vector<2x8xf32>, vector<2x8xf32>, vector<2x8xf32> -> vector<2x32xf32>
    %115 = vector.extract_strided_slice %30 {offsets = [4, 0], sizes = [2, 32], strides = [1, 1]} : vector<8x32xf32> to vector<2x32xf32>
    %116 = vector.extract_strided_slice %115 {offsets = [0, 0], sizes = [2, 8], strides = [1, 1]} : vector<2x32xf32> to vector<2x8xf32>
    %117 = vector.extract_strided_slice %115 {offsets = [0, 8], sizes = [2, 8], strides = [1, 1]} : vector<2x32xf32> to vector<2x8xf32>
    %118 = vector.extract_strided_slice %115 {offsets = [0, 16], sizes = [2, 8], strides = [1, 1]} : vector<2x32xf32> to vector<2x8xf32>
    %119 = vector.extract_strided_slice %115 {offsets = [0, 24], sizes = [2, 8], strides = [1, 1]} : vector<2x32xf32> to vector<2x8xf32>
    %120 = tpu.concatenate %116, %117, %118, %119 in 0 : vector<2x8xf32>, vector<2x8xf32>, vector<2x8xf32>, vector<2x8xf32> -> vector<8x8xf32>
    %121 = vector.extract_strided_slice %35 {offsets = [4, 0], sizes = [2, 32], strides = [1, 1]} : vector<8x32xf32> to vector<2x32xf32>
    %122 = vector.extract_strided_slice %121 {offsets = [0, 0], sizes = [2, 8], strides = [1, 1]} : vector<2x32xf32> to vector<2x8xf32>
    %123 = vector.extract_strided_slice %121 {offsets = [0, 8], sizes = [2, 8], strides = [1, 1]} : vector<2x32xf32> to vector<2x8xf32>
    %124 = vector.extract_strided_slice %121 {offsets = [0, 16], sizes = [2, 8], strides = [1, 1]} : vector<2x32xf32> to vector<2x8xf32>
    %125 = vector.extract_strided_slice %121 {offsets = [0, 24], sizes = [2, 8], strides = [1, 1]} : vector<2x32xf32> to vector<2x8xf32>
    %126 = tpu.concatenate %122, %123, %124, %125 in 0 : vector<2x8xf32>, vector<2x8xf32>, vector<2x8xf32>, vector<2x8xf32> -> vector<8x8xf32>
    %127 = vector.extract_strided_slice %40 {offsets = [4, 0], sizes = [2, 32], strides = [1, 1]} : vector<8x32xf32> to vector<2x32xf32>
    %128 = vector.extract_strided_slice %127 {offsets = [0, 0], sizes = [2, 8], strides = [1, 1]} : vector<2x32xf32> to vector<2x8xf32>
    %129 = vector.extract_strided_slice %127 {offsets = [0, 8], sizes = [2, 8], strides = [1, 1]} : vector<2x32xf32> to vector<2x8xf32>
    %130 = vector.extract_strided_slice %127 {offsets = [0, 16], sizes = [2, 8], strides = [1, 1]} : vector<2x32xf32> to vector<2x8xf32>
    %131 = vector.extract_strided_slice %127 {offsets = [0, 24], sizes = [2, 8], strides = [1, 1]} : vector<2x32xf32> to vector<2x8xf32>
    %132 = tpu.concatenate %128, %129, %130, %131 in 0 : vector<2x8xf32>, vector<2x8xf32>, vector<2x8xf32>, vector<2x8xf32> -> vector<8x8xf32>
    %cst_35 = arith.constant dense<0.000000e+00> : vector<8x8xf32>
    %133 = tpu.matmul %120, %126, %cst_35 {dimension_numbers = #tpu.dot_dimension_numbers<[1], [1], [0], [0], [0, 0, 1, 0], [], []>} : vector<8x8xf32>, vector<8x8xf32>, vector<8x8xf32> -> vector<8x8xf32>
    %cst_36 = arith.constant 0.353553385 : f32
    %134 = vector.broadcast %cst_36 : f32 to vector<8x8xf32>
    %135 = arith.mulf %133, %134 : vector<8x8xf32>
    %cst_37 = arith.constant dense<0xFF800000> : vector<8xf32>
    %136 = vector.multi_reduction <maximumf>, %135, %cst_37 [1] : vector<8x8xf32> to vector<8xf32>
    %137 = vector.shape_cast %136 : vector<8xf32> to vector<8x1xf32>
    %138 = vector.broadcast %137 : vector<8x1xf32> to vector<8x8xf32>
    %139 = arith.subf %135, %138 : vector<8x8xf32>
    %140 = math.exp %139 : vector<8x8xf32>
    %cst_38 = arith.constant dense<0.000000e+00> : vector<8xf32>
    %141 = vector.multi_reduction <add>, %140, %cst_38 [1] : vector<8x8xf32> to vector<8xf32>
    %142 = vector.shape_cast %141 : vector<8xf32> to vector<8x1xf32>
    %143 = tpu.reciprocal %142 : vector<8x1xf32> -> vector<8x1xf32>
    %144 = vector.broadcast %143 : vector<8x1xf32> to vector<8x8xf32>
    %145 = arith.mulf %140, %144 : vector<8x8xf32>
    %cst_39 = arith.constant dense<0.000000e+00> : vector<8x8xf32>
    %146 = tpu.matmul %145, %132, %cst_39 {dimension_numbers = #tpu.dot_dimension_numbers<[1], [0], [0], [1], [0, 0, 1, 1], [], []>} : vector<8x8xf32>, vector<8x8xf32>, vector<8x8xf32> -> vector<8x8xf32>
    %147 = vector.extract_strided_slice %146 {offsets = [0, 0], sizes = [2, 8], strides = [1, 1]} : vector<8x8xf32> to vector<2x8xf32>
    %148 = vector.extract_strided_slice %146 {offsets = [2, 0], sizes = [2, 8], strides = [1, 1]} : vector<8x8xf32> to vector<2x8xf32>
    %149 = vector.extract_strided_slice %146 {offsets = [4, 0], sizes = [2, 8], strides = [1, 1]} : vector<8x8xf32> to vector<2x8xf32>
    %150 = vector.extract_strided_slice %146 {offsets = [6, 0], sizes = [2, 8], strides = [1, 1]} : vector<8x8xf32> to vector<2x8xf32>
    %151 = tpu.concatenate %147, %148, %149, %150 in 1 : vector<2x8xf32>, vector<2x8xf32>, vector<2x8xf32>, vector<2x8xf32> -> vector<2x32xf32>
    %152 = vector.extract_strided_slice %30 {offsets = [6, 0], sizes = [2, 32], strides = [1, 1]} : vector<8x32xf32> to vector<2x32xf32>
    %153 = vector.extract_strided_slice %152 {offsets = [0, 0], sizes = [2, 8], strides = [1, 1]} : vector<2x32xf32> to vector<2x8xf32>
    %154 = vector.extract_strided_slice %152 {offsets = [0, 8], sizes = [2, 8], strides = [1, 1]} : vector<2x32xf32> to vector<2x8xf32>
    %155 = vector.extract_strided_slice %152 {offsets = [0, 16], sizes = [2, 8], strides = [1, 1]} : vector<2x32xf32> to vector<2x8xf32>
    %156 = vector.extract_strided_slice %152 {offsets = [0, 24], sizes = [2, 8], strides = [1, 1]} : vector<2x32xf32> to vector<2x8xf32>
    %157 = tpu.concatenate %153, %154, %155, %156 in 0 : vector<2x8xf32>, vector<2x8xf32>, vector<2x8xf32>, vector<2x8xf32> -> vector<8x8xf32>
    %158 = vector.extract_strided_slice %35 {offsets = [6, 0], sizes = [2, 32], strides = [1, 1]} : vector<8x32xf32> to vector<2x32xf32>
    %159 = vector.extract_strided_slice %158 {offsets = [0, 0], sizes = [2, 8], strides = [1, 1]} : vector<2x32xf32> to vector<2x8xf32>
    %160 = vector.extract_strided_slice %158 {offsets = [0, 8], sizes = [2, 8], strides = [1, 1]} : vector<2x32xf32> to vector<2x8xf32>
    %161 = vector.extract_strided_slice %158 {offsets = [0, 16], sizes = [2, 8], strides = [1, 1]} : vector<2x32xf32> to vector<2x8xf32>
    %162 = vector.extract_strided_slice %158 {offsets = [0, 24], sizes = [2, 8], strides = [1, 1]} : vector<2x32xf32> to vector<2x8xf32>
    %163 = tpu.concatenate %159, %160, %161, %162 in 0 : vector<2x8xf32>, vector<2x8xf32>, vector<2x8xf32>, vector<2x8xf32> -> vector<8x8xf32>
    %164 = vector.extract_strided_slice %40 {offsets = [6, 0], sizes = [2, 32], strides = [1, 1]} : vector<8x32xf32> to vector<2x32xf32>
    %165 = vector.extract_strided_slice %164 {offsets = [0, 0], sizes = [2, 8], strides = [1, 1]} : vector<2x32xf32> to vector<2x8xf32>
    %166 = vector.extract_strided_slice %164 {offsets = [0, 8], sizes = [2, 8], strides = [1, 1]} : vector<2x32xf32> to vector<2x8xf32>
    %167 = vector.extract_strided_slice %164 {offsets = [0, 16], sizes = [2, 8], strides = [1, 1]} : vector<2x32xf32> to vector<2x8xf32>
    %168 = vector.extract_strided_slice %164 {offsets = [0, 24], sizes = [2, 8], strides = [1, 1]} : vector<2x32xf32> to vector<2x8xf32>
    %169 = tpu.concatenate %165, %166, %167, %168 in 0 : vector<2x8xf32>, vector<2x8xf32>, vector<2x8xf32>, vector<2x8xf32> -> vector<8x8xf32>
    %cst_40 = arith.constant dense<0.000000e+00> : vector<8x8xf32>
    %170 = tpu.matmul %157, %163, %cst_40 {dimension_numbers = #tpu.dot_dimension_numbers<[1], [1], [0], [0], [0, 0, 1, 0], [], []>} : vector<8x8xf32>, vector<8x8xf32>, vector<8x8xf32> -> vector<8x8xf32>
    %cst_41 = arith.constant 0.353553385 : f32
    %171 = vector.broadcast %cst_41 : f32 to vector<8x8xf32>
    %172 = arith.mulf %170, %171 : vector<8x8xf32>
    %cst_42 = arith.constant dense<0xFF800000> : vector<8xf32>
    %173 = vector.multi_reduction <maximumf>, %172, %cst_42 [1] : vector<8x8xf32> to vector<8xf32>
    %174 = vector.shape_cast %173 : vector<8xf32> to vector<8x1xf32>
    %175 = vector.broadcast %174 : vector<8x1xf32> to vector<8x8xf32>
    %176 = arith.subf %172, %175 : vector<8x8xf32>
    %177 = math.exp %176 : vector<8x8xf32>
    %cst_43 = arith.constant dense<0.000000e+00> : vector<8xf32>
    %178 = vector.multi_reduction <add>, %177, %cst_43 [1] : vector<8x8xf32> to vector<8xf32>
    %179 = vector.shape_cast %178 : vector<8xf32> to vector<8x1xf32>
    %180 = tpu.reciprocal %179 : vector<8x1xf32> -> vector<8x1xf32>
    %181 = vector.broadcast %180 : vector<8x1xf32> to vector<8x8xf32>
    %182 = arith.mulf %177, %181 : vector<8x8xf32>
    %cst_44 = arith.constant dense<0.000000e+00> : vector<8x8xf32>
    %183 = tpu.matmul %182, %169, %cst_44 {dimension_numbers = #tpu.dot_dimension_numbers<[1], [0], [0], [1], [0, 0, 1, 1], [], []>} : vector<8x8xf32>, vector<8x8xf32>, vector<8x8xf32> -> vector<8x8xf32>
    %184 = vector.extract_strided_slice %183 {offsets = [0, 0], sizes = [2, 8], strides = [1, 1]} : vector<8x8xf32> to vector<2x8xf32>
    %185 = vector.extract_strided_slice %183 {offsets = [2, 0], sizes = [2, 8], strides = [1, 1]} : vector<8x8xf32> to vector<2x8xf32>
    %186 = vector.extract_strided_slice %183 {offsets = [4, 0], sizes = [2, 8], strides = [1, 1]} : vector<8x8xf32> to vector<2x8xf32>
    %187 = vector.extract_strided_slice %183 {offsets = [6, 0], sizes = [2, 8], strides = [1, 1]} : vector<8x8xf32> to vector<2x8xf32>
    %188 = tpu.concatenate %184, %185, %186, %187 in 1 : vector<2x8xf32>, vector<2x8xf32>, vector<2x8xf32>, vector<2x8xf32> -> vector<2x32xf32>
    %189 = tpu.concatenate %77, %114, %151, %188 in 0 : vector<2x32xf32>, vector<2x32xf32>, vector<2x32xf32>, vector<2x32xf32> -> vector<8x32xf32>
    %c0_45 = arith.constant 0 : index
    %c0_46 = arith.constant 0 : index
    %190 = vector.load %arg10[%c0_45, %c0_46] : memref<32x32xf32, #tpu.memory_space<vmem>>, vector<32x32xf32>
    %cst_47 = arith.constant dense<0.000000e+00> : vector<8x32xf32>
    %191 = tpu.matmul %189, %190, %cst_47 {dimension_numbers = #tpu.dot_dimension_numbers<[1], [0], [0], [1], [0, 0, 1, 1], [], []>} : vector<8x32xf32>, vector<32x32xf32>, vector<8x32xf32> -> vector<8x32xf32>
    %192 = arith.addf %1, %191 : vector<8x32xf32>
    %c0_48 = arith.constant 0 : index
    %c0_49 = arith.constant 0 : index
    %193 = vector.load %arg11[%c0_48, %c0_49] : memref<1x32xf32, #tpu.memory_space<vmem>>, vector<1x32xf32>
    %194 = vector.broadcast %193 : vector<1x32xf32> to vector<8x32xf32>
    %195 = arith.addf %192, %194 : vector<8x32xf32>
    %c0_50 = arith.constant 0 : index
    %c0_51 = arith.constant 0 : index
    %196 = vector.load %arg12[%c0_50, %c0_51] : memref<1x32xf32, #tpu.memory_space<vmem>>, vector<1x32xf32>
    %c0_52 = arith.constant 0 : index
    %c0_53 = arith.constant 0 : index
    %197 = vector.load %arg13[%c0_52, %c0_53] : memref<1x32xf32, #tpu.memory_space<vmem>>, vector<1x32xf32>
    %cst_54 = arith.constant dense<0.000000e+00> : vector<8xf32>
    %198 = vector.multi_reduction <add>, %195, %cst_54 [1] : vector<8x32xf32> to vector<8xf32>
    %199 = vector.shape_cast %198 : vector<8xf32> to vector<8x1xf32>
    %cst_55 = arith.constant 3.200000e+01 : f32
    %200 = vector.broadcast %cst_55 : f32 to vector<8x1xf32>
    %201 = arith.divf %199, %200 : vector<8x1xf32>
    %202 = vector.broadcast %201 : vector<8x1xf32> to vector<8x32xf32>
    %203 = arith.subf %195, %202 : vector<8x32xf32>
    %204 = arith.mulf %203, %203 : vector<8x32xf32>
    %cst_56 = arith.constant dense<0.000000e+00> : vector<8xf32>
    %205 = vector.multi_reduction <add>, %204, %cst_56 [1] : vector<8x32xf32> to vector<8xf32>
    %206 = vector.shape_cast %205 : vector<8xf32> to vector<8x1xf32>
    %cst_57 = arith.constant 3.200000e+01 : f32
    %207 = vector.broadcast %cst_57 : f32 to vector<8x1xf32>
    %208 = arith.divf %206, %207 : vector<8x1xf32>
    %209 = vector.broadcast %201 : vector<8x1xf32> to vector<8x32xf32>
    %210 = arith.subf %195, %209 : vector<8x32xf32>
    %cst_58 = arith.constant 9.99999974E-6 : f32
    %211 = vector.broadcast %cst_58 : f32 to vector<8x1xf32>
    %212 = arith.addf %208, %211 : vector<8x1xf32>
    %213 = math.rsqrt %212 : vector<8x1xf32>
    %214 = vector.broadcast %213 : vector<8x1xf32> to vector<8x32xf32>
    %215 = arith.mulf %210, %214 : vector<8x32xf32>
    %216 = vector.broadcast %196 : vector<1x32xf32> to vector<8x32xf32>
    %217 = arith.mulf %215, %216 : vector<8x32xf32>
    %218 = vector.broadcast %197 : vector<1x32xf32> to vector<8x32xf32>
    %219 = arith.addf %217, %218 : vector<8x32xf32>
    %c0_59 = arith.constant 0 : index
    %c0_60 = arith.constant 0 : index
    %220 = vector.load %arg14[%c0_59, %c0_60] : memref<32x64xf32, #tpu.memory_space<vmem>>, vector<32x64xf32>
    %cst_61 = arith.constant dense<0.000000e+00> : vector<8x64xf32>
    %221 = tpu.matmul %219, %220, %cst_61 {dimension_numbers = #tpu.dot_dimension_numbers<[1], [0], [0], [1], [0, 0, 1, 1], [], []>} : vector<8x32xf32>, vector<32x64xf32>, vector<8x64xf32> -> vector<8x64xf32>
    %c0_62 = arith.constant 0 : index
    %c0_63 = arith.constant 0 : index
    %222 = vector.load %arg15[%c0_62, %c0_63] : memref<1x64xf32, #tpu.memory_space<vmem>>, vector<1x64xf32>
    %223 = vector.broadcast %222 : vector<1x64xf32> to vector<8x64xf32>
    %224 = arith.addf %221, %223 : vector<8x64xf32>
    %cst_64 = arith.constant 5.000000e-01 : f32
    %225 = vector.broadcast %cst_64 : f32 to vector<8x64xf32>
    %226 = arith.mulf %225, %224 : vector<8x64xf32>
    %cst_65 = arith.constant 0.707106769 : f32
    %227 = vector.broadcast %cst_65 : f32 to vector<8x64xf32>
    %228 = arith.mulf %224, %227 : vector<8x64xf32>
    %229 = math.erf %228 : vector<8x64xf32>
    %cst_66 = arith.constant 1.000000e+00 : f32
    %230 = vector.broadcast %cst_66 : f32 to vector<8x64xf32>
    %231 = arith.addf %230, %229 : vector<8x64xf32>
    %232 = arith.mulf %226, %231 : vector<8x64xf32>
    %c0_67 = arith.constant 0 : index
    %c0_68 = arith.constant 0 : index
    %233 = vector.load %arg16[%c0_67, %c0_68] : memref<64x32xf32, #tpu.memory_space<vmem>>, vector<64x32xf32>
    %cst_69 = arith.constant dense<0.000000e+00> : vector<8x32xf32>
    %234 = tpu.matmul %232, %233, %cst_69 {dimension_numbers = #tpu.dot_dimension_numbers<[1], [0], [0], [1], [0, 0, 1, 1], [], []>} : vector<8x64xf32>, vector<64x32xf32>, vector<8x32xf32> -> vector<8x32xf32>
    %c0_70 = arith.constant 0 : index
    %c0_71 = arith.constant 0 : index
    %235 = vector.load %arg17[%c0_70, %c0_71] : memref<1x32xf32, #tpu.memory_space<vmem>>, vector<1x32xf32>
    %236 = vector.broadcast %235 : vector<1x32xf32> to vector<8x32xf32>
    %237 = arith.addf %234, %236 : vector<8x32xf32>
    %238 = arith.addf %195, %237 : vector<8x32xf32>
    %c0_72 = arith.constant 0 : index
    %c0_73 = arith.constant 0 : index
    %c0_74 = arith.constant 0 : index
    %239 = vector.load %arg18[%c0_72, %c0_73, %c0_74] : memref<1x8x32xf32, #tpu.memory_space<vmem>>, vector<1x8x32xf32>
    %240 = vector.shape_cast %239 : vector<1x8x32xf32> to vector<8x32xf32>
    %241 = vector.shape_cast %238 : vector<8x32xf32> to vector<1x8x32xf32>
    tpu.vector_store %arg18[%c0_72, %c0_73, %c0_74], %241 {strides = array<i32>} : memref<1x8x32xf32, #tpu.memory_space<vmem>>, vector<1x8x32xf32>,
    return
  }
  func.func @transform_0(%arg0: i32) -> (i32, i32, i32) {
    %c0_i32 = arith.constant 0 : i32
    %c0_i32_0 = arith.constant 0 : i32
    %c0_i32_1 = arith.constant 0 : i32
    return %arg0, %c0_i32, %c0_i32_0 : i32, i32, i32
  }
  func.func @transform_1(%arg0: i32) -> (i32, i32) {
    %c0_i32 = arith.constant 0 : i32
    %c0_i32_0 = arith.constant 0 : i32
    %c0_i32_1 = arith.constant 0 : i32
    return %c0_i32, %c0_i32_0 : i32, i32
  }
  func.func @transform_2(%arg0: i32) -> (i32, i32) {
    %c0_i32 = arith.constant 0 : i32
    %c0_i32_0 = arith.constant 0 : i32
    %c0_i32_1 = arith.constant 0 : i32
    return %c0_i32, %c0_i32_0 : i32, i32
  }
  func.func @transform_3(%arg0: i32) -> (i32, i32) {
    %c0_i32 = arith.constant 0 : i32
    %c0_i32_0 = arith.constant 0 : i32
    %c0_i32_1 = arith.constant 0 : i32
    return %c0_i32, %c0_i32_0 : i32, i32
  }
  func.func @transform_4(%arg0: i32) -> (i32, i32) {
    %c0_i32 = arith.constant 0 : i32
    %c0_i32_0 = arith.constant 0 : i32
    %c0_i32_1 = arith.constant 0 : i32
    return %c0_i32, %c0_i32_0 : i32, i32
  }
  func.func @transform_5(%arg0: i32) -> (i32, i32) {
    %c0_i32 = arith.constant 0 : i32
    %c0_i32_0 = arith.constant 0 : i32
    %c0_i32_1 = arith.constant 0 : i32
    return %c0_i32, %c0_i32_0 : i32, i32
  }
  func.func @transform_6(%arg0: i32) -> (i32, i32) {
    %c0_i32 = arith.constant 0 : i32
    %c0_i32_0 = arith.constant 0 : i32
    %c0_i32_1 = arith.constant 0 : i32
    return %c0_i32, %c0_i32_0 : i32, i32
  }
  func.func @transform_7(%arg0: i32) -> (i32, i32) {
    %c0_i32 = arith.constant 0 : i32
    %c0_i32_0 = arith.constant 0 : i32
    %c0_i32_1 = arith.constant 0 : i32
    return %c0_i32, %c0_i32_0 : i32, i32
  }
  func.func @transform_8(%arg0: i32) -> (i32, i32) {
    %c0_i32 = arith.constant 0 : i32
    %c0_i32_0 = arith.constant 0 : i32
    %c0_i32_1 = arith.constant 0 : i32
    return %c0_i32, %c0_i32_0 : i32, i32
  }
  func.func @transform_9(%arg0: i32) -> (i32, i32) {
    %c0_i32 = arith.constant 0 : i32
    %c0_i32_0 = arith.constant 0 : i32
    %c0_i32_1 = arith.constant 0 : i32
    return %c0_i32, %c0_i32_0 : i32, i32
  }
  func.func @transform_10(%arg0: i32) -> (i32, i32) {
    %c0_i32 = arith.constant 0 : i32
    %c0_i32_0 = arith.constant 0 : i32
    %c0_i32_1 = arith.constant 0 : i32
    return %c0_i32, %c0_i32_0 : i32, i32
  }
  func.func @transform_11(%arg0: i32) -> (i32, i32) {
    %c0_i32 = arith.constant 0 : i32
    %c0_i32_0 = arith.constant 0 : i32
    %c0_i32_1 = arith.constant 0 : i32
    return %c0_i32, %c0_i32_0 : i32, i32
  }
  func.func @transform_12(%arg0: i32) -> (i32, i32) {
    %c0_i32 = arith.constant 0 : i32
    %c0_i32_0 = arith.constant 0 : i32
    %c0_i32_1 = arith.constant 0 : i32
    return %c0_i32, %c0_i32_0 : i32, i32
  }
  func.func @transform_13(%arg0: i32) -> (i32, i32) {
    %c0_i32 = arith.constant 0 : i32
    %c0_i32_0 = arith.constant 0 : i32
    %c0_i32_1 = arith.constant 0 : i32
    return %c0_i32, %c0_i32_0 : i32, i32
  }
  func.func @transform_14(%arg0: i32) -> (i32, i32) {
    %c0_i32 = arith.constant 0 : i32
    %c0_i32_0 = arith.constant 0 : i32
    %c0_i32_1 = arith.constant 0 : i32
    return %c0_i32, %c0_i32_0 : i32, i32
  }
  func.func @transform_15(%arg0: i32) -> (i32, i32) {
    %c0_i32 = arith.constant 0 : i32
    %c0_i32_0 = arith.constant 0 : i32
    %c0_i32_1 = arith.constant 0 : i32
    return %c0_i32, %c0_i32_0 : i32, i32
  }
  func.func @transform_16(%arg0: i32) -> (i32, i32) {
    %c0_i32 = arith.constant 0 : i32
    %c0_i32_0 = arith.constant 0 : i32
    %c0_i32_1 = arith.constant 0 : i32
    return %c0_i32, %c0_i32_0 : i32, i32
  }
  func.func @transform_17(%arg0: i32) -> (i32, i32, i32) {
    %c0_i32 = arith.constant 0 : i32
    %c0_i32_0 = arith.constant 0 : i32
    %c0_i32_1 = arith.constant 0 : i32
    return %arg0, %c0_i32, %c0_i32_0 : i32, i32, i32
  }
}

</mosaic_0001>

<llo_original>
// kernel: tpu_custom_call.1
$region0: #{tpu_custom_call.1}
  #allocation0 [shape = 'u32[]', space=smem, size = 0x4, offset = 0x4, fixed_abs, tag = 'smem constant byte address 0x4 - core index']
  #allocation1 [shape = 'u32[144,128]{1,0:T(1,128)}', space=vmem, size = 0x12000, scoped, tag = 'internal scratch']
  %s0 = inlined_call_operand.hbm [shape: f32[2,8,32], index: 0, kind: input, shape index: {}]
  %s1 = inlined_call_operand.vmem [shape: f32[1,32], index: 1, kind: input, shape index: {}]
  %s2 = inlined_call_operand.vmem [shape: f32[1,32], index: 2, kind: input, shape index: {}]
  %s3 = inlined_call_operand.vmem [shape: f32[32,32], index: 3, kind: input, shape index: {}]
  %s4 = inlined_call_operand.vmem [shape: f32[1,32], index: 4, kind: input, shape index: {}]
  %s5 = inlined_call_operand.vmem [shape: f32[32,32], index: 5, kind: input, shape index: {}]
  %s6 = inlined_call_operand.vmem [shape: f32[1,32], index: 6, kind: input, shape index: {}]
  %s7 = inlined_call_operand.vmem [shape: f32[32,32], index: 7, kind: input, shape index: {}]
  %s8 = inlined_call_operand.vmem [shape: f32[1,32], index: 8, kind: input, shape index: {}]
  %s9 = inlined_call_operand.hbm [shape: f32[32,32], index: 9, kind: input, shape index: {}]
  %s10 = inlined_call_operand.vmem [shape: f32[1,32], index: 10, kind: input, shape index: {}]
  %s11 = inlined_call_operand.vmem [shape: f32[1,32], index: 11, kind: input, shape index: {}]
  %s12 = inlined_call_operand.vmem [shape: f32[1,32], index: 12, kind: input, shape index: {}]
  %s13 = inlined_call_operand.hbm [shape: f32[32,64], index: 13, kind: input, shape index: {}]
  %s14 = inlined_call_operand.vmem [shape: f32[1,64], index: 14, kind: input, shape index: {}]
  %s15 = inlined_call_operand.vmem [shape: f32[64,32], index: 15, kind: input, shape index: {}]
  %s16 = inlined_call_operand.vmem [shape: f32[1,32], index: 16, kind: input, shape index: {}]
  %s17 = inlined_call_operand.hbm [shape: f32[2,8,32], index: 17, kind: output, shape index: {}]
  %s18 = sld [smem:[#allocation0]]
  $region113: #{tpu_custom_call.1} parent=0
    _
  %s20 = ssub.s32 1, %s18
  %s21 = scalar_select 0, %s20, %s18
  $region1: #{tpu_custom_call.1} parent=0
    #allocation2 [shape = 'u8[8192]{0}', space=vmem, size = 0x2000, scoped, tag = 'input window, operand 0']
    #allocation3 [shape = 's32[2]{0}', space=sflag, size = 0x8, scoped, tag = 'scoped memory for tpu_custom_call.1']
    #allocation4 [shape = 's32[2]{0}', space=sflag, size = 0x8, scoped, tag = 'scoped memory for tpu_custom_call.1']
    #allocation5 [shape = 'u8[16384]{0}', space=vmem, size = 0x4000, scoped, tag = 'input window, operand 9, single buffered']
    #allocation6 [shape = 's32[1]{0}', space=sflag, size = 0x4, scoped, tag = 'scoped memory for tpu_custom_call.1']
    #allocation7 [shape = 'u8[16384]{0}', space=vmem, size = 0x4000, scoped, tag = 'input window, operand 13, single buffered']
    #allocation8 [shape = 'u8[8192]{0}', space=vmem, size = 0x2000, scoped, tag = 'output window, operand 0']
    %22 = vsyncpa [#allocation3], 0
    %s23 = scalar_lea.sflag [#allocation3], 1
    %24 = vsyncpa %s23, 0
    %25 = vsyncpa [#allocation6], 0
    %26 = vsyncpa [#allocation4], 0
    %s27 = scalar_lea.sflag [#allocation4], 1
    %28 = vsyncpa %s27, 0
    loop: start=0, step=1, limit=4
    $region2: #{tpu_custom_call.1} parent=1 // loop_pre_header
      _
    $region3: #{tpu_custom_call.1} parent=1 // loop_header
      %s30 = sphi 0, %s34
      %p31 = scmp.ge.s32.totalorder %s30, 4
      %s40 = sphi 0, %s42
      %s43 = sphi 0, %s40
      %s44 = sphi 0, %s43
      %s60 = sphi 0, %s44
      %s64 = sphi 0, %s64
      %s66 = sphi 0, %s64
      %s67 = sphi 0, %s66
      %s81 = sphi 0, %s67
      %s85 = sphi 0, %s85
      %s87 = sphi 0, %s85
      %s88 = sphi 0, %s87
      %s102 = sphi 0, %s88
      %s106 = sphi 0, %s106
      %s108 = sphi 0, %s106
      %s109 = sphi 0, %s108
      %s123 = sphi 0, %s109
      %s127 = sphi 0, %s127
      %s129 = sphi 0, %s127
      %s130 = sphi 0, %s129
      %s144 = sphi 0, %s130
      %s148 = sphi 0, %s148
      %s150 = sphi 0, %s148
      %s151 = sphi 0, %s150
      %s165 = sphi 0, %s151
      %s169 = sphi 0, %s169
      %s171 = sphi 0, %s169
      %s172 = sphi 0, %s171
      %s186 = sphi 0, %s172
      %s190 = sphi 0, %s190
      %s192 = sphi 0, %s190
      %s193 = sphi 0, %s192
      %s207 = sphi 0, %s193
      %s211 = sphi 0, %s211
      %s213 = sphi 0, %s211
      %s214 = sphi 0, %s213
      %s228 = sphi 0, %s214
      %s232 = sphi 0, %s232
      %s234 = sphi 0, %s232
      %s235 = sphi 0, %s234
      %s249 = sphi 0, %s235
      %s253 = sphi 0, %s253
      %s255 = sphi 0, %s253
      %s256 = sphi 0, %s255
      %s270 = sphi 0, %s256
      %s274 = sphi 0, %s274
      %s276 = sphi 0, %s274
      %s277 = sphi 0, %s276
      %s291 = sphi 0, %s277
      %s295 = sphi 0, %s295
      %s297 = sphi 0, %s295
      %s298 = sphi 0, %s297
      %s312 = sphi 0, %s298
      %s316 = sphi 0, %s316
      %s318 = sphi 0, %s316
      %s319 = sphi 0, %s318
      %s333 = sphi 0, %s319
      %s337 = sphi 0, %s337
      %s339 = sphi 0, %s337
      %s340 = sphi 0, %s339
      %s354 = sphi 0, %s340
      %s358 = sphi 0, %s358
      %s360 = sphi 0, %s358
      %s361 = sphi 0, %s360
      %s375 = sphi 0, %s361
      %s379 = sphi 0, %s379
      %s381 = sphi 0, %s379
      %s382 = sphi 0, %s381
      %s396 = sphi 0, %s382
      %s402 = sphi 0, %s404
      %s405 = sphi 0, %s402
      %s406 = sphi 0, %s405
      %s422 = sphi 0, %s406
    $region4: #{tpu_custom_call.1} parent=1 // loop_header_branch
      %33 = sbr.rel (%p31) target = $region8
    $region5: #{tpu_custom_call.1} parent=1 // loop_body
      %s35 = ssub.s32 %s30, 1
      %s36 = ssub.s32 %s30, 2
      %s37 = sadd.s32 %s30, 1
      %s38 = ssub.s32 %s30, %s37
      %p39 = scmp.eq.s32.totalorder %s38, 0
      %s41 = sadd.s32 %s40, 1
      %s42 = scalar_select %p39, %s40, %s41
      %p45 = pneg %p39
      %p46 = scmp.eq.s32.totalorder %s30, 1
      %p47 = por %p45, %p46
      %p48 = scmp.ne.s32.totalorder %s40, %s43
      %p49 = scmp.eq.s32.totalorder %s30, 0
      %p50 = por %p48, %p49
      %p51 = scmp.ne.s32.totalorder %s40, %s43
      %p52 = scmp.eq.s32.totalorder %s35, 1
      %p53 = por %p51, %p52
      %p54 = scmp.ne.s32.totalorder %s43, %s44
      %p55 = scmp.eq.s32.totalorder %s35, 0
      %p56 = por %p54, %p55
      %p57 = scmp.ne.s32.totalorder %s43, %s44
      %p58 = scmp.eq.s32.totalorder %s36, 1
      %p59 = por %p57, %p58
      %p61 = scmp.ne.s32.totalorder %s44, %s60
      %p62 = scmp.eq.s32.totalorder %s36, 0
      %p63 = por %p61, %p62
      %s65 = sadd.s32 %s64, 1
      %p68 = scmp.eq.s32.totalorder %s30, 1
      %p69 = scmp.ne.s32.totalorder %s64, %s66
      %p70 = scmp.eq.s32.totalorder %s30, 0
      %p71 = por %p69, %p70
      %p72 = scmp.ne.s32.totalorder %s64, %s66
      %p73 = scmp.eq.s32.totalorder %s35, 1
      %p74 = por %p72, %p73
      %p75 = scmp.ne.s32.totalorder %s66, %s67
      %p76 = scmp.eq.s32.totalorder %s35, 0
      %p77 = por %p75, %p76
      %p78 = scmp.ne.s32.totalorder %s66, %s67
      %p79 = scmp.eq.s32.totalorder %s36, 1
      %p80 = por %p78, %p79
      %p82 = scmp.ne.s32.totalorder %s67, %s81
      %p83 = scmp.eq.s32.totalorder %s36, 0
      %p84 = por %p82, %p83
      %s86 = sadd.s32 %s85, 1
      %p89 = scmp.eq.s32.totalorder %s30, 1
      %p90 = scmp.ne.s32.totalorder %s85, %s87
      %p91 = scmp.eq.s32.totalorder %s30, 0
      %p92 = por %p90, %p91
      %p93 = scmp.ne.s32.totalorder %s85, %s87
      %p94 = scmp.eq.s32.totalorder %s35, 1
      %p95 = por %p93, %p94
      %p96 = scmp.ne.s32.totalorder %s87, %s88
      %p97 = scmp.eq.s32.totalorder %s35, 0
      %p98 = por %p96, %p97
      %p99 = scmp.ne.s32.totalorder %s87, %s88
      %p100 = scmp.eq.s32.totalorder %s36, 1
      %p101 = por %p99, %p100
      %p103 = scmp.ne.s32.totalorder %s88, %s102
      %p104 = scmp.eq.s32.totalorder %s36, 0
      %p105 = por %p103, %p104
      %s107 = sadd.s32 %s106, 1
      %p110 = scmp.eq.s32.totalorder %s30, 1
      %p111 = scmp.ne.s32.totalorder %s106, %s108
      %p112 = scmp.eq.s32.totalorder %s30, 0
      %p113 = por %p111, %p112
      %p114 = scmp.ne.s32.totalorder %s106, %s108
      %p115 = scmp.eq.s32.totalorder %s35, 1
      %p116 = por %p114, %p115
      %p117 = scmp.ne.s32.totalorder %s108, %s109
      %p118 = scmp.eq.s32.totalorder %s35, 0
      %p119 = por %p117, %p118
      %p120 = scmp.ne.s32.totalorder %s108, %s109
      %p121 = scmp.eq.s32.totalorder %s36, 1
      %p122 = por %p120, %p121
      %p124 = scmp.ne.s32.totalorder %s109, %s123
      %p125 = scmp.eq.s32.totalorder %s36, 0
      %p126 = por %p124, %p125
      %s128 = sadd.s32 %s127, 1
      %p131 = scmp.eq.s32.totalorder %s30, 1
      %p132 = scmp.ne.s32.totalorder %s127, %s129
      %p133 = scmp.eq.s32.totalorder %s30, 0
      %p134 = por %p132, %p133
      %p135 = scmp.ne.s32.totalorder %s127, %s129
      %p136 = scmp.eq.s32.totalorder %s35, 1
      %p137 = por %p135, %p136
      %p138 = scmp.ne.s32.totalorder %s129, %s130
      %p139 = scmp.eq.s32.totalorder %s35, 0
      %p140 = por %p138, %p139
      %p141 = scmp.ne.s32.totalorder %s129, %s130
      %p142 = scmp.eq.s32.totalorder %s36, 1
      %p143 = por %p141, %p142
      %p145 = scmp.ne.s32.totalorder %s130, %s144
      %p146 = scmp.eq.s32.totalorder %s36, 0
      %p147 = por %p145, %p146
      %s149 = sadd.s32 %s148, 1
      %p152 = scmp.eq.s32.totalorder %s30, 1
      %p153 = scmp.ne.s32.totalorder %s148, %s150
      %p154 = scmp.eq.s32.totalorder %s30, 0
      %p155 = por %p153, %p154
      %p156 = scmp.ne.s32.totalorder %s148, %s150
      %p157 = scmp.eq.s32.totalorder %s35, 1
      %p158 = por %p156, %p157
      %p159 = scmp.ne.s32.totalorder %s150, %s151
      %p160 = scmp.eq.s32.totalorder %s35, 0
      %p161 = por %p159, %p160
      %p162 = scmp.ne.s32.totalorder %s150, %s151
      %p163 = scmp.eq.s32.totalorder %s36, 1
      %p164 = por %p162, %p163
      %p166 = scmp.ne.s32.totalorder %s151, %s165
      %p167 = scmp.eq.s32.totalorder %s36, 0
      %p168 = por %p166, %p167
      %s170 = sadd.s32 %s169, 1
      %p173 = scmp.eq.s32.totalorder %s30, 1
      %p174 = scmp.ne.s32.totalorder %s169, %s171
      %p175 = scmp.eq.s32.totalorder %s30, 0
      %p176 = por %p174, %p175
      %p177 = scmp.ne.s32.totalorder %s169, %s171
      %p178 = scmp.eq.s32.totalorder %s35, 1
      %p179 = por %p177, %p178
      %p180 = scmp.ne.s32.totalorder %s171, %s172
      %p181 = scmp.eq.s32.totalorder %s35, 0
      %p182 = por %p180, %p181
      %p183 = scmp.ne.s32.totalorder %s171, %s172
      %p184 = scmp.eq.s32.totalorder %s36, 1
      %p185 = por %p183, %p184
      %p187 = scmp.ne.s32.totalorder %s172, %s186
      %p188 = scmp.eq.s32.totalorder %s36, 0
      %p189 = por %p187, %p188
      %s191 = sadd.s32 %s190, 1
      %p194 = scmp.eq.s32.totalorder %s30, 1
      %p195 = scmp.ne.s32.totalorder %s190, %s192
      %p196 = scmp.eq.s32.totalorder %s30, 0
      %p197 = por %p195, %p196
      %p198 = scmp.ne.s32.totalorder %s190, %s192
      %p199 = scmp.eq.s32.totalorder %s35, 1
      %p200 = por %p198, %p199
      %p201 = scmp.ne.s32.totalorder %s192, %s193
      %p202 = scmp.eq.s32.totalorder %s35, 0
      %p203 = por %p201, %p202
      %p204 = scmp.ne.s32.totalorder %s192, %s193
      %p205 = scmp.eq.s32.totalorder %s36, 1
      %p206 = por %p204, %p205
      %p208 = scmp.ne.s32.totalorder %s193, %s207
      %p209 = scmp.eq.s32.totalorder %s36, 0
      %p210 = por %p208, %p209
      %s212 = sadd.s32 %s211, 1
      %p215 = scmp.eq.s32.totalorder %s30, 1
      %p216 = scmp.ne.s32.totalorder %s211, %s213
      %p217 = scmp.eq.s32.totalorder %s30, 0
      %p218 = por %p216, %p217
      %p219 = scmp.ne.s32.totalorder %s211, %s213
      %p220 = scmp.eq.s32.totalorder %s35, 1
      %p221 = por %p219, %p220
      %p222 = scmp.ne.s32.totalorder %s213, %s214
      %p223 = scmp.eq.s32.totalorder %s35, 0
      %p224 = por %p222, %p223
      %p225 = scmp.ne.s32.totalorder %s213, %s214
      %p226 = scmp.eq.s32.totalorder %s36, 1
      %p227 = por %p225, %p226
      %p229 = scmp.ne.s32.totalorder %s214, %s228
      %p230 = scmp.eq.s32.totalorder %s36, 0
      %p231 = por %p229, %p230
      %s233 = sadd.s32 %s232, 1
      %p236 = scmp.eq.s32.totalorder %s30, 1
      %p237 = scmp.ne.s32.totalorder %s232, %s234
      %p238 = scmp.eq.s32.totalorder %s30, 0
      %p239 = por %p237, %p238
      %p240 = scmp.ne.s32.totalorder %s232, %s234
      %p241 = scmp.eq.s32.totalorder %s35, 1
      %p242 = por %p240, %p241
      %p243 = scmp.ne.s32.totalorder %s234, %s235
      %p244 = scmp.eq.s32.totalorder %s35, 0
      %p245 = por %p243, %p244
      %p246 = scmp.ne.s32.totalorder %s234, %s235
      %p247 = scmp.eq.s32.totalorder %s36, 1
      %p248 = por %p246, %p247
      %p250 = scmp.ne.s32.totalorder %s235, %s249
      %p251 = scmp.eq.s32.totalorder %s36, 0
      %p252 = por %p250, %p251
      %s254 = sadd.s32 %s253, 1
      %p257 = scmp.eq.s32.totalorder %s30, 1
      %p258 = scmp.ne.s32.totalorder %s253, %s255
      %p259 = scmp.eq.s32.totalorder %s30, 0
      %p260 = por %p258, %p259
      %p261 = scmp.ne.s32.totalorder %s253, %s255
      %p262 = scmp.eq.s32.totalorder %s35, 1
      %p263 = por %p261, %p262
      %p264 = scmp.ne.s32.totalorder %s255, %s256
      %p265 = scmp.eq.s32.totalorder %s35, 0
      %p266 = por %p264, %p265
      %p267 = scmp.ne.s32.totalorder %s255, %s256
      %p268 = scmp.eq.s32.totalorder %s36, 1
      %p269 = por %p267, %p268
      %p271 = scmp.ne.s32.totalorder %s256, %s270
      %p272 = scmp.eq.s32.totalorder %s36, 0
      %p273 = por %p271, %p272
      %s275 = sadd.s32 %s274, 1
      %p278 = scmp.eq.s32.totalorder %s30, 1
      %p279 = scmp.ne.s32.totalorder %s274, %s276
      %p280 = scmp.eq.s32.totalorder %s30, 0
      %p281 = por %p279, %p280
      %p282 = scmp.ne.s32.totalorder %s274, %s276
      %p283 = scmp.eq.s32.totalorder %s35, 1
      %p284 = por %p282, %p283
      %p285 = scmp.ne.s32.totalorder %s276, %s277
      %p286 = scmp.eq.s32.totalorder %s35, 0
      %p287 = por %p285, %p286
      %p288 = scmp.ne.s32.totalorder %s276, %s277
      %p289 = scmp.eq.s32.totalorder %s36, 1
      %p290 = por %p288, %p289
      %p292 = scmp.ne.s32.totalorder %s277, %s291
      %p293 = scmp.eq.s32.totalorder %s36, 0
      %p294 = por %p292, %p293
      %s296 = sadd.s32 %s295, 1
      %p299 = scmp.eq.s32.totalorder %s30, 1
      %p300 = scmp.ne.s32.totalorder %s295, %s297
      %p301 = scmp.eq.s32.totalorder %s30, 0
      %p302 = por %p300, %p301
      %p303 = scmp.ne.s32.totalorder %s295, %s297
      %p304 = scmp.eq.s32.totalorder %s35, 1
      %p305 = por %p303, %p304
      %p306 = scmp.ne.s32.totalorder %s297, %s298
      %p307 = scmp.eq.s32.totalorder %s35, 0
      %p308 = por %p306, %p307
      %p309 = scmp.ne.s32.totalorder %s297, %s298
      %p310 = scmp.eq.s32.totalorder %s36, 1
      %p311 = por %p309, %p310
      %p313 = scmp.ne.s32.totalorder %s298, %s312
      %p314 = scmp.eq.s32.totalorder %s36, 0
      %p315 = por %p313, %p314
      %s317 = sadd.s32 %s316, 1
      %p320 = scmp.eq.s32.totalorder %s30, 1
      %p321 = scmp.ne.s32.totalorder %s316, %s318
      %p322 = scmp.eq.s32.totalorder %s30, 0
      %p323 = por %p321, %p322
      %p324 = scmp.ne.s32.totalorder %s316, %s318
      %p325 = scmp.eq.s32.totalorder %s35, 1
      %p326 = por %p324, %p325
      %p327 = scmp.ne.s32.totalorder %s318, %s319
      %p328 = scmp.eq.s32.totalorder %s35, 0
      %p329 = por %p327, %p328
      %p330 = scmp.ne.s32.totalorder %s318, %s319
      %p331 = scmp.eq.s32.totalorder %s36, 1
      %p332 = por %p330, %p331
      %p334 = scmp.ne.s32.totalorder %s319, %s333
      %p335 = scmp.eq.s32.totalorder %s36, 0
      %p336 = por %p334, %p335
      %s338 = sadd.s32 %s337, 1
      %p341 = scmp.eq.s32.totalorder %s30, 1
      %p342 = scmp.ne.s32.totalorder %s337, %s339
      %p343 = scmp.eq.s32.totalorder %s30, 0
      %p344 = por %p342, %p343
      %p345 = scmp.ne.s32.totalorder %s337, %s339
      %p346 = scmp.eq.s32.totalorder %s35, 1
      %p347 = por %p345, %p346
      %p348 = scmp.ne.s32.totalorder %s339, %s340
      %p349 = scmp.eq.s32.totalorder %s35, 0
      %p350 = por %p348, %p349
      %p351 = scmp.ne.s32.totalorder %s339, %s340
      %p352 = scmp.eq.s32.totalorder %s36, 1
      %p353 = por %p351, %p352
      %p355 = scmp.ne.s32.totalorder %s340, %s354
      %p356 = scmp.eq.s32.totalorder %s36, 0
      %p357 = por %p355, %p356
      %s359 = sadd.s32 %s358, 1
      %p362 = scmp.eq.s32.totalorder %s30, 1
      %p363 = scmp.ne.s32.totalorder %s358, %s360
      %p364 = scmp.eq.s32.totalorder %s30, 0
      %p365 = por %p363, %p364
      %p366 = scmp.ne.s32.totalorder %s358, %s360
      %p367 = scmp.eq.s32.totalorder %s35, 1
      %p368 = por %p366, %p367
      %p369 = scmp.ne.s32.totalorder %s360, %s361
      %p370 = scmp.eq.s32.totalorder %s35, 0
      %p371 = por %p369, %p370
      %p372 = scmp.ne.s32.totalorder %s360, %s361
      %p373 = scmp.eq.s32.totalorder %s36, 1
      %p374 = por %p372, %p373
      %p376 = scmp.ne.s32.totalorder %s361, %s375
      %p377 = scmp.eq.s32.totalorder %s36, 0
      %p378 = por %p376, %p377
      %s380 = sadd.s32 %s379, 1
      %p383 = scmp.eq.s32.totalorder %s30, 1
      %p384 = scmp.ne.s32.totalorder %s379, %s381
      %p385 = scmp.eq.s32.totalorder %s30, 0
      %p386 = por %p384, %p385
      %p387 = scmp.ne.s32.totalorder %s379, %s381
      %p388 = scmp.eq.s32.totalorder %s35, 1
      %p389 = por %p387, %p388
      %p390 = scmp.ne.s32.totalorder %s381, %s382
      %p391 = scmp.eq.s32.totalorder %s35, 0
      %p392 = por %p390, %p391
      %p393 = scmp.ne.s32.totalorder %s381, %s382
      %p394 = scmp.eq.s32.totalorder %s36, 1
      %p395 = por %p393, %p394
      %p397 = scmp.ne.s32.totalorder %s382, %s396
      %p398 = scmp.eq.s32.totalorder %s36, 0
      %p399 = por %p397, %p398
      %s400 = ssub.s32 %s30, %s37
      %p401 = scmp.eq.s32.totalorder %s400, 0
      %s403 = sadd.s32 %s402, 1
      %s404 = scalar_select %p401, %s402, %s403
      %p407 = pneg %p401
      %p408 = scmp.eq.s32.totalorder %s30, 1
      %p409 = por %p407, %p408
      %p410 = scmp.ne.s32.totalorder %s402, %s405
      %p411 = scmp.eq.s32.totalorder %s30, 0
      %p412 = por %p410, %p411
      %p413 = scmp.ne.s32.totalorder %s402, %s405
      %p414 = scmp.eq.s32.totalorder %s35, 1
      %p415 = por %p413, %p414
      %p416 = scmp.ne.s32.totalorder %s405, %s406
      %p417 = scmp.eq.s32.totalorder %s35, 0
      %p418 = por %p416, %p417
      %p419 = scmp.ne.s32.totalorder %s405, %s406
      %p420 = scmp.eq.s32.totalorder %s36, 1
      %p421 = por %p419, %p420
      %p423 = scmp.ne.s32.totalorder %s406, %s422
      %p424 = scmp.eq.s32.totalorder %s36, 0
      %p425 = por %p423, %p424
      %p426 = scmp.le.s32.totalorder 1, %s30
      %p427 = scmp.lt.s32.totalorder %s30, 3
      %p428 = pnand %p426, %p427
      %p429 = pneg %p428
      // Predicated region
      $region9: #{tpu_custom_call.1} parent=5 // pred_check
        _
      $region10: #{tpu_custom_call.1} parent=5 // pred_check_branch
        %431 = sbr.rel (%p428) target = $region12
      $region11: #{tpu_custom_call.1} parent=5 // pred_region
        %s432 = ssub.s32 %s30, 1
        // Predicated region
        $region13: #{tpu_custom_call.1} parent=11 // pred_check
          %p433 = pneg %p77
        $region14: #{tpu_custom_call.1} parent=11 // pred_check_branch
          %435 = sbr.rel (%p433) target = $region16
        $region15: #{tpu_custom_call.1} parent=11 // pred_region
          _
        $region16: #{tpu_custom_call.1} parent=11 // pred_fallthru
          _
        // Predicated region
        $region17: #{tpu_custom_call.1} parent=11 // pred_check
          %p436 = pneg %p98
        $region18: #{tpu_custom_call.1} parent=11 // pred_check_branch
          %438 = sbr.rel (%p436) target = $region20
        $region19: #{tpu_custom_call.1} parent=11 // pred_region
          _
        $region20: #{tpu_custom_call.1} parent=11 // pred_fallthru
          _
        // Predicated region
        $region21: #{tpu_custom_call.1} parent=11 // pred_check
          %p439 = pneg %p119
        $region22: #{tpu_custom_call.1} parent=11 // pred_check_branch
          %441 = sbr.rel (%p439) target = $region24
        $region23: #{tpu_custom_call.1} parent=11 // pred_region
          _
        $region24: #{tpu_custom_call.1} parent=11 // pred_fallthru
          _
        // Predicated region
        $region25: #{tpu_custom_call.1} parent=11 // pred_check
          %p442 = pneg %p140
        $region26: #{tpu_custom_call.1} parent=11 // pred_check_branch
          %444 = sbr.rel (%p442) target = $region28
        $region27: #{tpu_custom_call.1} parent=11 // pred_region
          _
        $region28: #{tpu_custom_call.1} parent=11 // pred_fallthru
          _
        // Predicated region
        $region29: #{tpu_custom_call.1} parent=11 // pred_check
          %p445 = pneg %p161
        $region30: #{tpu_custom_call.1} parent=11 // pred_check_branch
          %447 = sbr.rel (%p445) target = $region32
        $region31: #{tpu_custom_call.1} parent=11 // pred_region
          _
        $region32: #{tpu_custom_call.1} parent=11 // pred_fallthru
          _
        // Predicated region
        $region33: #{tpu_custom_call.1} parent=11 // pred_check
          %p448 = pneg %p182
        $region34: #{tpu_custom_call.1} parent=11 // pred_check_branch
          %450 = sbr.rel (%p448) target = $region36
        $region35: #{tpu_custom_call.1} parent=11 // pred_region
          _
        $region36: #{tpu_custom_call.1} parent=11 // pred_fallthru
          _
        // Predicated region
        $region37: #{tpu_custom_call.1} parent=11 // pred_check
          %p451 = pneg %p203
        $region38: #{tpu_custom_call.1} parent=11 // pred_check_branch
          %453 = sbr.rel (%p451) target = $region40
        $region39: #{tpu_custom_call.1} parent=11 // pred_region
          _
        $region40: #{tpu_custom_call.1} parent=11 // pred_fallthru
          _
        // Predicated region
        $region41: #{tpu_custom_call.1} parent=11 // pred_check
          %p454 = pneg %p224
        $region42: #{tpu_custom_call.1} parent=11 // pred_check_branch
          %456 = sbr.rel (%p454) target = $region44
        $region43: #{tpu_custom_call.1} parent=11 // pred_region
          _
        $region44: #{tpu_custom_call.1} parent=11 // pred_fallthru
          _
        // Predicated region
        $region45: #{tpu_custom_call.1} parent=11 // pred_check
          %p457 = pneg %p245
        $region46: #{tpu_custom_call.1} parent=11 // pred_check_branch
          %459 = sbr.rel (%p457) target = $region48
        $region47: #{tpu_custom_call.1} parent=11 // pred_region
          %s461 = ssub.s32 512, 512
          %462 = vsyncadd [#allocation6], %s461
          %s463 = sshll.u32 [#allocation5], 4
          %s464 = int_to_ptr.vmem [resolvable:$true] %s463
          %469 = dma.hbm_to_vmem [thread:$0]  %s9, 512, %s464, [#allocation6], 128, 128, 8
        $region48: #{tpu_custom_call.1} parent=11 // pred_fallthru
          _
        // Predicated region
        $region49: #{tpu_custom_call.1} parent=11 // pred_check
          %p470 = pneg %p266
        $region50: #{tpu_custom_call.1} parent=11 // pred_check_branch
          %472 = sbr.rel (%p470) target = $region52
        $region51: #{tpu_custom_call.1} parent=11 // pred_region
          _
        $region52: #{tpu_custom_call.1} parent=11 // pred_fallthru
          _
        // Predicated region
        $region53: #{tpu_custom_call.1} parent=11 // pred_check
          %p473 = pneg %p287
        $region54: #{tpu_custom_call.1} parent=11 // pred_check_branch
          %475 = sbr.rel (%p473) target = $region56
        $region55: #{tpu_custom_call.1} parent=11 // pred_region
          _
        $region56: #{tpu_custom_call.1} parent=11 // pred_fallthru
          _
        // Predicated region
        $region57: #{tpu_custom_call.1} parent=11 // pred_check
          %p476 = pneg %p308
        $region58: #{tpu_custom_call.1} parent=11 // pred_check_branch
          %478 = sbr.rel (%p476) target = $region60
        $region59: #{tpu_custom_call.1} parent=11 // pred_region
          _
        $region60: #{tpu_custom_call.1} parent=11 // pred_fallthru
          _
        // Predicated region
        $region61: #{tpu_custom_call.1} parent=11 // pred_check
          %p479 = pneg %p329
        $region62: #{tpu_custom_call.1} parent=11 // pred_check_branch
          %481 = sbr.rel (%p479) target = $region64
        $region63: #{tpu_custom_call.1} parent=11 // pred_region
          %s483 = ssub.s32 512, 512
          %484 = vsyncadd [#allocation6], %s483
          %s485 = sshll.u32 [#allocation7], 4
          %s486 = int_to_ptr.vmem [resolvable:$true] %s485
          %491 = dma.hbm_to_vmem [thread:$0]  %s13, 512, %s486, [#allocation6], 128, 128, 8
        $region64: #{tpu_custom_call.1} parent=11 // pred_fallthru
          _
        // Predicated region
        $region65: #{tpu_custom_call.1} parent=11 // pred_check
          %p492 = pneg %p350
        $region66: #{tpu_custom_call.1} parent=11 // pred_check_branch
          %494 = sbr.rel (%p492) target = $region68
        $region67: #{tpu_custom_call.1} parent=11 // pred_region
          _
        $region68: #{tpu_custom_call.1} parent=11 // pred_fallthru
          _
        // Predicated region
        $region69: #{tpu_custom_call.1} parent=11 // pred_check
          %p495 = pneg %p371
        $region70: #{tpu_custom_call.1} parent=11 // pred_check_branch
          %497 = sbr.rel (%p495) target = $region72
        $region71: #{tpu_custom_call.1} parent=11 // pred_region
          _
        $region72: #{tpu_custom_call.1} parent=11 // pred_fallthru
          _
        // Predicated region
        $region73: #{tpu_custom_call.1} parent=11 // pred_check
          %p498 = pneg %p392
        $region74: #{tpu_custom_call.1} parent=11 // pred_check_branch
          %500 = sbr.rel (%p498) target = $region76
        $region75: #{tpu_custom_call.1} parent=11 // pred_region
          _
        $region76: #{tpu_custom_call.1} parent=11 // pred_fallthru
          _
      $region12: #{tpu_custom_call.1} parent=5 // pred_fallthru
        _
      %p501 = scmp.lt.s32.totalorder %s30, 2
      // Predicated region
      $region77: #{tpu_custom_call.1} parent=5 // pred_check
        %p502 = pneg %p501
      $region78: #{tpu_custom_call.1} parent=5 // pred_check_branch
        %504 = sbr.rel (%p502) target = $region80
      $region79: #{tpu_custom_call.1} parent=5 // pred_region
        // Predicated region
        $region81: #{tpu_custom_call.1} parent=79 // pred_check
          %p505 = pneg %p50
        $region82: #{tpu_custom_call.1} parent=79 // pred_check_branch
          %507 = sbr.rel (%p505) target = $region84
        $region83: #{tpu_custom_call.1} parent=79 // pred_region
          %s508 = sand.u32 %s40, 1
          %s509 = scalar_lea.sflag [#allocation3], %s508
          %s510 = sand.u32 %s40, 1
          %s511 = smul.addr %s510, 8
          %s512 = scalar_lea.vmem [#allocation2], %s511
          %s514 = ssub.s32 128, 128
          %515 = vsyncadd %s509, %s514
          %s516 = smul.addr %s30, 128
          %s517 = scalar_lea.hbm %s0, %s516
          %s519 = sshll.u32 %s512, 4
          %s520 = int_to_ptr.vmem [resolvable:$true] %s519
          %522 = dma.hbm_to_vmem [thread:$0]  %s517, 128, %s520, %s509
        $region84: #{tpu_custom_call.1} parent=79 // pred_fallthru
          _
      $region80: #{tpu_custom_call.1} parent=5 // pred_fallthru
        _
      %p523 = scmp.le.s32.totalorder 1, %s30
      %p524 = scmp.lt.s32.totalorder %s30, 3
      %p525 = pnand %p523, %p524
      %p526 = pneg %p525
      // Predicated region
      $region85: #{tpu_custom_call.1} parent=5 // pred_check
        _
      $region86: #{tpu_custom_call.1} parent=5 // pred_check_branch
        %528 = sbr.rel (%p525) target = $region88
      $region87: #{tpu_custom_call.1} parent=5 // pred_region
        %s529 = ssub.s32 %s30, 1
        %s530 = sand.u32 %s43, 1
        %s531 = scalar_lea.sflag [#allocation3], %s530
        %s532 = sand.u32 %s43, 1
        %s533 = smul.addr %s532, 8
        %s534 = scalar_lea.vmem [#allocation2], %s533
        // Predicated region
        $region89: #{tpu_custom_call.1} parent=87 // pred_check
          %p535 = pneg %p56
        $region90: #{tpu_custom_call.1} parent=87 // pred_check_branch
          %537 = sbr.rel (%p535) target = $region92
        $region91: #{tpu_custom_call.1} parent=87 // pred_region
          %538 = dma.done %s531, 128
        $region92: #{tpu_custom_call.1} parent=87 // pred_fallthru
          _
        // Predicated region
        $region93: #{tpu_custom_call.1} parent=87 // pred_check
          %p539 = pneg %p245
        $region94: #{tpu_custom_call.1} parent=87 // pred_check_branch
          %541 = sbr.rel (%p539) target = $region96
        $region95: #{tpu_custom_call.1} parent=87 // pred_region
          %542 = dma.done [#allocation6], 512
        $region96: #{tpu_custom_call.1} parent=87 // pred_fallthru
          _
        // Predicated region
        $region97: #{tpu_custom_call.1} parent=87 // pred_check
          %p543 = pneg %p329
        $region98: #{tpu_custom_call.1} parent=87 // pred_check_branch
          %545 = sbr.rel (%p543) target = $region100
        $region99: #{tpu_custom_call.1} parent=87 // pred_region
          %546 = dma.done [#allocation6], 512
        $region100: #{tpu_custom_call.1} parent=87 // pred_fallthru
          _
        %s547 = sand.u32 %s43, 1
        %s548 = scalar_lea.sflag [#allocation3], %s547
        %s549 = sand.u32 %s43, 1
        %s550 = smul.addr %s549, 8
        %s551 = scalar_lea.vmem [#allocation2], %s550
        %p552 = pneg %p56
        %p553 = pneg %p53
        %p554 = pneg %p77
        %p555 = pneg %p74
        %p556 = pneg %p98
        %p557 = pneg %p95
        %p558 = pneg %p119
        %p559 = pneg %p116
        %p560 = pneg %p140
        %p561 = pneg %p137
        %p562 = pneg %p161
        %p563 = pneg %p158
        %p564 = pneg %p182
        %p565 = pneg %p179
        %p566 = pneg %p203
        %p567 = pneg %p200
        %p568 = pneg %p224
        %p569 = pneg %p221
        %p570 = pneg %p245
        %p571 = pneg %p242
        %p572 = pneg %p266
        %p573 = pneg %p263
        %p574 = pneg %p287
        %p575 = pneg %p284
        %p576 = pneg %p308
        %p577 = pneg %p305
        %p578 = pneg %p329
        %p579 = pneg %p326
        %p580 = pneg %p350
        %p581 = pneg %p347
        %p582 = pneg %p371
        %p583 = pneg %p368
        %p584 = pneg %p392
        %p585 = pneg %p389
        %p586 = pneg %p418
        %p587 = pneg %p415
        %s588 = sand.u32 %s405, 1
        %s589 = scalar_lea.sflag [#allocation4], %s588
        %s590 = sand.u32 %s405, 1
        %s591 = smul.addr %s590, 8
        %s592 = scalar_lea.vmem [#allocation8], %s591
        %v593 = vld [vmem:[%s534] sm:$0xff]
        %v594 = vld [vmem:[%s1] sm:$0x1]
        %v595 = vld [vmem:[%s2] sm:$0x1]
        %vm596 = vcmask 261120
        %v597 = vsel %vm596, %v593, 0.0
        %598 = vadd.xlane.f32.xlu0 %v597
        %v599 = vpop.xlane.xlu0 %598
        %v600 = vrcp.pop 32.0
        %v601 = vmul.f32 %v599, %v600
        %v602 = vsub.f32 %v593, %v601
        %v603 = vmul.f32 %v602, %v602
        %v604 = vsel %vm596, %v603, 0.0
        %605 = vadd.xlane.f32.xlu0 %v604
        %v606 = vpop.xlane.xlu0 %605
        %v607 = vmul.f32 %v606, %v600
        %v608 = vadd.f32 %v607, 1e-05
        %v609 = vrsqrt.pop %v608
        %v610 = vmul.f32 %v602, %v609
        %v612 = vlaneseq
        %v613 = vshrl.u32 %v612, 7
        %v614 = vsub.s32 0, %v613
        %v615 = vrot.slane %v594, %v614
        %v617 = vmul.f32 %v610, %v615
        %v619 = vlaneseq
        %v620 = vshrl.u32 %v619, 7
        %v621 = vsub.s32 0, %v620
        %v622 = vrot.slane %v595, %v621
        %v624 = vadd.f32 %v617, %v622
        %v625 = vld [vmem:[%s3] sm:$0xff]
        %v626 = vld [vmem:[%s3 + $0x8] sm:$0xff]
        %v627 = vld [vmem:[%s3 + $0x10] sm:$0xff]
        %v628 = vld [vmem:[%s3 + $0x18] sm:$0xff]
        %v629 = vld [vmem:[%s4] sm:$0x1]
        %v631 = vlaneseq
        %v632 = vshrl.u32 %v631, 7
        %v633 = vsub.s32 0, %v632
        %v634 = vrot.slane %v629, %v633
        %v637 = vsel %vm596, %v624, 0
        %639 = vmatprep.subr.mxu0 0.0
        %640 = vmatpush1.msra.mxu0 0.0
        %641 = vmatprep.subr.mxu0 0.0
        %642 = vmatpush1.msra.mxu0 0.0
        %643 = vmatprep.subr.mxu0 0.0
        %644 = vmatpush1.msra.mxu0 0.0
        %645 = vmatprep.subr.mxu0 0.0
        %646 = vmatpush1.msra.mxu0 0.0
        %647 = vmatprep.subr.mxu0 0.0
        %648 = vmatpush1.msra.mxu0 0.0
        %649 = vmatprep.subr.mxu0 0.0
        %650 = vmatpush1.msra.mxu0 0.0
        %651 = vmatprep.subr.mxu0 0.0
        %652 = vmatpush1.msra.mxu0 0.0
        %653 = vmatprep.subr.mxu0 0.0
        %654 = vmatpush1.msra.mxu0 0.0
        %655 = vmatprep.subr.mxu0 0.0
        %656 = vmatpush1.msra.mxu0 0.0
        %657 = vmatprep.subr.mxu0 0.0
        %658 = vmatpush1.msra.mxu0 0.0
        %659 = vmatprep.subr.mxu0 0.0
        %660 = vmatpush1.msra.mxu0 0.0
        %661 = vmatprep.subr.mxu0 0.0
        %662 = vmatpush1.msra.mxu0 0.0
        %663 = vmatprep.subr.mxu0 0.0
        %664 = vmatpush1.msra.mxu0 %v628
        %665 = vmatprep.subr.mxu0 0.0
        %666 = vmatpush1.msra.mxu0 %v627
        %667 = vmatprep.subr.mxu0 0.0
        %668 = vmatpush1.msra.mxu0 %v626
        %669 = vmatprep.subr.mxu0 0.0
        %670 = vmatpush1.msra.mxu0 %v625
        %671 = vmatprep.subr.mxu0 0.0
        %672 = vmatpush2.msra.mxu0 0.0
        %673 = vmatprep.subr.mxu0 0.0
        %674 = vmatpush2.msra.mxu0 0.0
        %675 = vmatprep.subr.mxu0 0.0
        %676 = vmatpush2.msra.mxu0 0.0
        %677 = vmatprep.subr.mxu0 0.0
        %678 = vmatpush2.msra.mxu0 0.0
        %679 = vmatprep.subr.mxu0 0.0
        %680 = vmatpush2.msra.mxu0 0.0
        %681 = vmatprep.subr.mxu0 0.0
        %682 = vmatpush2.msra.mxu0 0.0
        %683 = vmatprep.subr.mxu0 0.0
        %684 = vmatpush2.msra.mxu0 0.0
        %685 = vmatprep.subr.mxu0 0.0
        %686 = vmatpush2.msra.mxu0 0.0
        %687 = vmatprep.subr.mxu0 0.0
        %688 = vmatpush2.msra.mxu0 0.0
        %689 = vmatprep.subr.mxu0 0.0
        %690 = vmatpush2.msra.mxu0 0.0
        %691 = vmatprep.subr.mxu0 0.0
        %692 = vmatpush2.msra.mxu0 0.0
        %693 = vmatprep.subr.mxu0 0.0
        %694 = vmatpush2.msra.mxu0 0.0
        %695 = vmatprep.subr.mxu0 0.0
        %696 = vmatpush2.msra.mxu0 0.0
        %697 = vmatprep.subr.mxu0 0.0
        %698 = vmatpush2.msra.mxu0 0.0
        %699 = vmatprep.subr.mxu0 0.0
        %700 = vmatpush2.msra.mxu0 0.0
        %701 = vmatprep.subr.mxu0 0.0
        %702 = vmatpush2.msra.mxu0 0.0
        %703 = vmatprep.mubr.f32.mxu0 0.0
        %704 = vmatmul.mubr.f32.gmra.mxu0 %v637
        %v705 = vpop.f32.mrf.mxu0
        %v706 = vadd.f32 %v634, %v705
        %v707 = vpop.f32.mrf.mxu0
        %708 = vdwg.mxu0
        %v709 = vld [vmem:[%s5] sm:$0xff]
        %v710 = vld [vmem:[%s5 + $0x8] sm:$0xff]
        %v711 = vld [vmem:[%s5 + $0x10] sm:$0xff]
        %v712 = vld [vmem:[%s5 + $0x18] sm:$0xff]
        %v713 = vld [vmem:[%s6] sm:$0x1]
        %v715 = vlaneseq
        %v716 = vshrl.u32 %v715, 7
        %v717 = vsub.s32 0, %v716
        %v718 = vrot.slane %v713, %v717
        %720 = vmatprep.subr.mxu0 0.0
        %721 = vmatpush1.msra.mxu0 0.0
        %722 = vmatprep.subr.mxu0 0.0
        %723 = vmatpush1.msra.mxu0 0.0
        %724 = vmatprep.subr.mxu0 0.0
        %725 = vmatpush1.msra.mxu0 0.0
        %726 = vmatprep.subr.mxu0 0.0
        %727 = vmatpush1.msra.mxu0 0.0
        %728 = vmatprep.subr.mxu0 0.0
        %729 = vmatpush1.msra.mxu0 0.0
        %730 = vmatprep.subr.mxu0 0.0
        %731 = vmatpush1.msra.mxu0 0.0
        %732 = vmatprep.subr.mxu0 0.0
        %733 = vmatpush1.msra.mxu0 0.0
        %734 = vmatprep.subr.mxu0 0.0
        %735 = vmatpush1.msra.mxu0 0.0
        %736 = vmatprep.subr.mxu0 0.0
        %737 = vmatpush1.msra.mxu0 0.0
        %738 = vmatprep.subr.mxu0 0.0
        %739 = vmatpush1.msra.mxu0 0.0
        %740 = vmatprep.subr.mxu0 0.0
        %741 = vmatpush1.msra.mxu0 0.0
        %742 = vmatprep.subr.mxu0 0.0
        %743 = vmatpush1.msra.mxu0 0.0
        %744 = vmatprep.subr.mxu0 0.0
        %745 = vmatpush1.msra.mxu0 %v712
        %746 = vmatprep.subr.mxu0 0.0
        %747 = vmatpush1.msra.mxu0 %v711
        %748 = vmatprep.subr.mxu0 0.0
        %749 = vmatpush1.msra.mxu0 %v710
        %750 = vmatprep.subr.mxu0 0.0
        %751 = vmatpush1.msra.mxu0 %v709
        %752 = vmatprep.subr.mxu0 0.0
        %753 = vmatpush2.msra.mxu0 0.0
        %754 = vmatprep.subr.mxu0 0.0
        %755 = vmatpush2.msra.mxu0 0.0
        %756 = vmatprep.subr.mxu0 0.0
        %757 = vmatpush2.msra.mxu0 0.0
        %758 = vmatprep.subr.mxu0 0.0
        %759 = vmatpush2.msra.mxu0 0.0
        %760 = vmatprep.subr.mxu0 0.0
        %761 = vmatpush2.msra.mxu0 0.0
        %762 = vmatprep.subr.mxu0 0.0
        %763 = vmatpush2.msra.mxu0 0.0
        %764 = vmatprep.subr.mxu0 0.0
        %765 = vmatpush2.msra.mxu0 0.0
        %766 = vmatprep.subr.mxu0 0.0
        %767 = vmatpush2.msra.mxu0 0.0
        %768 = vmatprep.subr.mxu0 0.0
        %769 = vmatpush2.msra.mxu0 0.0
        %770 = vmatprep.subr.mxu0 0.0
        %771 = vmatpush2.msra.mxu0 0.0
        %772 = vmatprep.subr.mxu0 0.0
        %773 = vmatpush2.msra.mxu0 0.0
        %774 = vmatprep.subr.mxu0 0.0
        %775 = vmatpush2.msra.mxu0 0.0
        %776 = vmatprep.subr.mxu0 0.0
        %777 = vmatpush2.msra.mxu0 0.0
        %778 = vmatprep.subr.mxu0 0.0
        %779 = vmatpush2.msra.mxu0 0.0
        %780 = vmatprep.subr.mxu0 0.0
        %781 = vmatpush2.msra.mxu0 0.0
        %782 = vmatprep.subr.mxu0 0.0
        %783 = vmatpush2.msra.mxu0 0.0
        %784 = vmatprep.mubr.f32.mxu0 0.0
        %785 = vmatmul.mubr.f32.gmra.mxu0 %v637
        %v786 = vpop.f32.mrf.mxu0
        %v787 = vadd.f32 %v718, %v786
        %v788 = vpop.f32.mrf.mxu0
        %789 = vdwg.mxu0
        %v790 = vld [vmem:[%s7] sm:$0xff]
        %v791 = vld [vmem:[%s7 + $0x8] sm:$0xff]
        %v792 = vld [vmem:[%s7 + $0x10] sm:$0xff]
        %v793 = vld [vmem:[%s7 + $0x18] sm:$0xff]
        %v794 = vld [vmem:[%s8] sm:$0x1]
        %v796 = vlaneseq
        %v797 = vshrl.u32 %v796, 7
        %v798 = vsub.s32 0, %v797
        %v799 = vrot.slane %v794, %v798
        %801 = vmatprep.subr.mxu0 0.0
        %802 = vmatpush1.msra.mxu0 0.0
        %803 = vmatprep.subr.mxu0 0.0
        %804 = vmatpush1.msra.mxu0 0.0
        %805 = vmatprep.subr.mxu0 0.0
        %806 = vmatpush1.msra.mxu0 0.0
        %807 = vmatprep.subr.mxu0 0.0
        %808 = vmatpush1.msra.mxu0 0.0
        %809 = vmatprep.subr.mxu0 0.0
        %810 = vmatpush1.msra.mxu0 0.0
        %811 = vmatprep.subr.mxu0 0.0
        %812 = vmatpush1.msra.mxu0 0.0
        %813 = vmatprep.subr.mxu0 0.0
        %814 = vmatpush1.msra.mxu0 0.0
        %815 = vmatprep.subr.mxu0 0.0
        %816 = vmatpush1.msra.mxu0 0.0
        %817 = vmatprep.subr.mxu0 0.0
        %818 = vmatpush1.msra.mxu0 0.0
        %819 = vmatprep.subr.mxu0 0.0
        %820 = vmatpush1.msra.mxu0 0.0
        %821 = vmatprep.subr.mxu0 0.0
        %822 = vmatpush1.msra.mxu0 0.0
        %823 = vmatprep.subr.mxu0 0.0
        %824 = vmatpush1.msra.mxu0 0.0
        %825 = vmatprep.subr.mxu0 0.0
        %826 = vmatpush1.msra.mxu0 %v793
        %827 = vmatprep.subr.mxu0 0.0
        %828 = vmatpush1.msra.mxu0 %v792
        %829 = vmatprep.subr.mxu0 0.0
        %830 = vmatpush1.msra.mxu0 %v791
        %831 = vmatprep.subr.mxu0 0.0
        %832 = vmatpush1.msra.mxu0 %v790
        %833 = vmatprep.subr.mxu0 0.0
        %834 = vmatpush2.msra.mxu0 0.0
        %835 = vmatprep.subr.mxu0 0.0
        %836 = vmatpush2.msra.mxu0 0.0
        %837 = vmatprep.subr.mxu0 0.0
        %838 = vmatpush2.msra.mxu0 0.0
        %839 = vmatprep.subr.mxu0 0.0
        %840 = vmatpush2.msra.mxu0 0.0
        %841 = vmatprep.subr.mxu0 0.0
        %842 = vmatpush2.msra.mxu0 0.0
        %843 = vmatprep.subr.mxu0 0.0
        %844 = vmatpush2.msra.mxu0 0.0
        %845 = vmatprep.subr.mxu0 0.0
        %846 = vmatpush2.msra.mxu0 0.0
        %847 = vmatprep.subr.mxu0 0.0
        %848 = vmatpush2.msra.mxu0 0.0
        %849 = vmatprep.subr.mxu0 0.0
        %850 = vmatpush2.msra.mxu0 0.0
        %851 = vmatprep.subr.mxu0 0.0
        %852 = vmatpush2.msra.mxu0 0.0
        %853 = vmatprep.subr.mxu0 0.0
        %854 = vmatpush2.msra.mxu0 0.0
        %855 = vmatprep.subr.mxu0 0.0
        %856 = vmatpush2.msra.mxu0 0.0
        %857 = vmatprep.subr.mxu0 0.0
        %858 = vmatpush2.msra.mxu0 0.0
        %859 = vmatprep.subr.mxu0 0.0
        %860 = vmatpush2.msra.mxu0 0.0
        %861 = vmatprep.subr.mxu0 0.0
        %862 = vmatpush2.msra.mxu0 0.0
        %863 = vmatprep.subr.mxu0 0.0
        %864 = vmatpush2.msra.mxu0 0.0
        %865 = vmatprep.mubr.f32.mxu0 0.0
        %866 = vmatmul.mubr.f32.gmra.mxu0 %v637
        %v867 = vpop.f32.mrf.mxu0
        %v868 = vadd.f32 %v799, %v867
        %v869 = vpop.f32.mrf.mxu0
        %870 = vdwg.mxu0
        %v872 = vrot.slane %v706, 6
        %873 = vrot.lane.b32.xlu0 %v872, 120
        %v874 = vpop.permute.xlu0 %873
        %v876 = vrot.slane %v706, 4
        %877 = vrot.lane.b32.xlu0 %v876, 112
        %v878 = vpop.permute.xlu0 %877
        %v880 = vrot.slane %v706, 2
        %881 = vrot.lane.b32.xlu0 %v880, 104
        %v882 = vpop.permute.xlu0 %881
        %vm884 = vcmask 1041408
        %v885 = vsel %vm884, %v706, %v874
        %vm886 = vcmask 1043456
        %v887 = vsel %vm886, %v885, %v878
        %vm888 = vcmask 1045504
        %v889 = vsel %vm888, %v887, %v882
        %v891 = vrot.slane %v787, 6
        %892 = vrot.lane.b32.xlu0 %v891, 120
        %v893 = vpop.permute.xlu0 %892
        %v895 = vrot.slane %v787, 4
        %896 = vrot.lane.b32.xlu0 %v895, 112
        %v897 = vpop.permute.xlu0 %896
        %v899 = vrot.slane %v787, 2
        %900 = vrot.lane.b32.xlu0 %v899, 104
        %v901 = vpop.permute.xlu0 %900
        %v903 = vsel %vm884, %v787, %v893
        %v904 = vsel %vm886, %v903, %v897
        %v905 = vsel %vm888, %v904, %v901
        %v907 = vrot.slane %v868, 6
        %908 = vrot.lane.b32.xlu0 %v907, 120
        %v909 = vpop.permute.xlu0 %908
        %v911 = vrot.slane %v868, 4
        %912 = vrot.lane.b32.xlu0 %v911, 112
        %v913 = vpop.permute.xlu0 %912
        %v915 = vrot.slane %v868, 2
        %916 = vrot.lane.b32.xlu0 %v915, 104
        %v917 = vpop.permute.xlu0 %916
        %v919 = vsel %vm884, %v868, %v909
        %v920 = vsel %vm886, %v919, %v913
        %v921 = vsel %vm888, %v920, %v917
        %vm922 = vcmask 64512
        %v924 = vsel %vm922, %v889, 0
        %v927 = vsel %vm922, %v905, 0
        %929 = vmatprep.subr.mxu0 0.0
        %930 = vmatpush1.xpose.msra.mxu0 0.0
        %931 = vmatprep.subr.mxu0 0.0
        %932 = vmatpush1.xpose.msra.mxu0 0.0
        %933 = vmatprep.subr.mxu0 0.0
        %934 = vmatpush1.xpose.msra.mxu0 0.0
        %935 = vmatprep.subr.mxu0 0.0
        %936 = vmatpush1.xpose.msra.mxu0 0.0
        %937 = vmatprep.subr.mxu0 0.0
        %938 = vmatpush1.xpose.msra.mxu0 0.0
        %939 = vmatprep.subr.mxu0 0.0
        %940 = vmatpush1.xpose.msra.mxu0 0.0
        %941 = vmatprep.subr.mxu0 0.0
        %942 = vmatpush1.xpose.msra.mxu0 0.0
        %943 = vmatprep.subr.mxu0 0.0
        %944 = vmatpush1.xpose.msra.mxu0 0.0
        %945 = vmatprep.subr.mxu0 0.0
        %946 = vmatpush1.xpose.msra.mxu0 0.0
        %947 = vmatprep.subr.mxu0 0.0
        %948 = vmatpush1.xpose.msra.mxu0 0.0
        %949 = vmatprep.subr.mxu0 0.0
        %950 = vmatpush1.xpose.msra.mxu0 0.0
        %951 = vmatprep.subr.mxu0 0.0
        %952 = vmatpush1.xpose.msra.mxu0 0.0
        %953 = vmatprep.subr.mxu0 0.0
        %954 = vmatpush1.xpose.msra.mxu0 0.0
        %955 = vmatprep.subr.mxu0 0.0
        %956 = vmatpush1.xpose.msra.mxu0 0.0
        %957 = vmatprep.subr.mxu0 0.0
        %958 = vmatpush1.xpose.msra.mxu0 0.0
        %959 = vmatprep.subr.mxu0 0.0
        %960 = vmatpush1.xpose.msra.mxu0 %v927
        %961 = vmatprep.subr.mxu0 0.0
        %962 = vmatpush2.xpose.msra.mxu0 0.0
        %963 = vmatprep.subr.mxu0 0.0
        %964 = vmatpush2.xpose.msra.mxu0 0.0
        %965 = vmatprep.subr.mxu0 0.0
        %966 = vmatpush2.xpose.msra.mxu0 0.0
        %967 = vmatprep.subr.mxu0 0.0
        %968 = vmatpush2.xpose.msra.mxu0 0.0
        %969 = vmatprep.subr.mxu0 0.0
        %970 = vmatpush2.xpose.msra.mxu0 0.0
        %971 = vmatprep.subr.mxu0 0.0
        %972 = vmatpush2.xpose.msra.mxu0 0.0
        %973 = vmatprep.subr.mxu0 0.0
        %974 = vmatpush2.xpose.msra.mxu0 0.0
        %975 = vmatprep.subr.mxu0 0.0
        %976 = vmatpush2.xpose.msra.mxu0 0.0
        %977 = vmatprep.subr.mxu0 0.0
        %978 = vmatpush2.xpose.msra.mxu0 0.0
        %979 = vmatprep.subr.mxu0 0.0
        %980 = vmatpush2.xpose.msra.mxu0 0.0
        %981 = vmatprep.subr.mxu0 0.0
        %982 = vmatpush2.xpose.msra.mxu0 0.0
        %983 = vmatprep.subr.mxu0 0.0
        %984 = vmatpush2.xpose.msra.mxu0 0.0
        %985 = vmatprep.subr.mxu0 0.0
        %986 = vmatpush2.xpose.msra.mxu0 0.0
        %987 = vmatprep.subr.mxu0 0.0
        %988 = vmatpush2.xpose.msra.mxu0 0.0
        %989 = vmatprep.subr.mxu0 0.0
        %990 = vmatpush2.xpose.msra.mxu0 0.0
        %991 = vmatprep.subr.mxu0 0.0
        %992 = vmatpush2.xpose.msra.mxu0 0.0
        %993 = vmatprep.mubr.f32.mxu0 0.0
        %994 = vmatmul.mubr.f32.gmra.mxu0 %v924
        %v995 = vpop.f32.mrf.mxu0
        %v996 = vadd.f32 0.0, %v995
        %v997 = vpop.f32.mrf.mxu0
        %998 = vdwg.mxu0
        %v999 = vmul.f32 %v996, 0.35355338
        %v1000 = vsel %vm922, %v999, -inf
        %1001 = vmax.xlane.f32.xlu0 %v1000
        %v1002 = vpop.xlane.xlu0 %1001
        %v1003 = vsub.f32 %v999, %v1002
        %v1004 = vmul.f32 %v1003, 1.442695
        %v1005 = vpow.pop %v1004
        %v1006 = vsel %vm922, %v1005, 0.0
        %1007 = vadd.xlane.f32.xlu0 %v1006
        %v1008 = vpop.xlane.xlu0 %1007
        %v1009 = vrcp.pop %v1008
        %v1010 = vmul.f32 %v1005, %v1009
        %v1012 = vsel %vm922, %v1010, 0
        %1014 = vmatprep.subr.mxu0 0.0
        %1015 = vmatpush1.msra.mxu0 0.0
        %1016 = vmatprep.subr.mxu0 0.0
        %1017 = vmatpush1.msra.mxu0 0.0
        %1018 = vmatprep.subr.mxu0 0.0
        %1019 = vmatpush1.msra.mxu0 0.0
        %1020 = vmatprep.subr.mxu0 0.0
        %1021 = vmatpush1.msra.mxu0 0.0
        %1022 = vmatprep.subr.mxu0 0.0
        %1023 = vmatpush1.msra.mxu0 0.0
        %1024 = vmatprep.subr.mxu0 0.0
        %1025 = vmatpush1.msra.mxu0 0.0
        %1026 = vmatprep.subr.mxu0 0.0
        %1027 = vmatpush1.msra.mxu0 0.0
        %1028 = vmatprep.subr.mxu0 0.0
        %1029 = vmatpush1.msra.mxu0 0.0
        %1030 = vmatprep.subr.mxu0 0.0
        %1031 = vmatpush1.msra.mxu0 0.0
        %1032 = vmatprep.subr.mxu0 0.0
        %1033 = vmatpush1.msra.mxu0 0.0
        %1034 = vmatprep.subr.mxu0 0.0
        %1035 = vmatpush1.msra.mxu0 0.0
        %1036 = vmatprep.subr.mxu0 0.0
        %1037 = vmatpush1.msra.mxu0 0.0
        %1038 = vmatprep.subr.mxu0 0.0
        %1039 = vmatpush1.msra.mxu0 0.0
        %1040 = vmatprep.subr.mxu0 0.0
        %1041 = vmatpush1.msra.mxu0 0.0
        %1042 = vmatprep.subr.mxu0 0.0
        %1043 = vmatpush1.msra.mxu0 0.0
        %1044 = vmatprep.subr.mxu0 0.0
        %1045 = vmatpush1.msra.mxu0 %v921
        %1046 = vmatprep.subr.mxu0 0.0
        %1047 = vmatpush2.msra.mxu0 0.0
        %1048 = vmatprep.subr.mxu0 0.0
        %1049 = vmatpush2.msra.mxu0 0.0
        %1050 = vmatprep.subr.mxu0 0.0
        %1051 = vmatpush2.msra.mxu0 0.0
        %1052 = vmatprep.subr.mxu0 0.0
        %1053 = vmatpush2.msra.mxu0 0.0
        %1054 = vmatprep.subr.mxu0 0.0
        %1055 = vmatpush2.msra.mxu0 0.0
        %1056 = vmatprep.subr.mxu0 0.0
        %1057 = vmatpush2.msra.mxu0 0.0
        %1058 = vmatprep.subr.mxu0 0.0
        %1059 = vmatpush2.msra.mxu0 0.0
        %1060 = vmatprep.subr.mxu0 0.0
        %1061 = vmatpush2.msra.mxu0 0.0
        %1062 = vmatprep.subr.mxu0 0.0
        %1063 = vmatpush2.msra.mxu0 0.0
        %1064 = vmatprep.subr.mxu0 0.0
        %1065 = vmatpush2.msra.mxu0 0.0
        %1066 = vmatprep.subr.mxu0 0.0
        %1067 = vmatpush2.msra.mxu0 0.0
        %1068 = vmatprep.subr.mxu0 0.0
        %1069 = vmatpush2.msra.mxu0 0.0
        %1070 = vmatprep.subr.mxu0 0.0
        %1071 = vmatpush2.msra.mxu0 0.0
        %1072 = vmatprep.subr.mxu0 0.0
        %1073 = vmatpush2.msra.mxu0 0.0
        %1074 = vmatprep.subr.mxu0 0.0
        %1075 = vmatpush2.msra.mxu0 0.0
        %1076 = vmatprep.subr.mxu0 0.0
        %1077 = vmatpush2.msra.mxu0 0.0
        %1078 = vmatprep.mubr.f32.mxu0 0.0
        %1079 = vmatmul.mubr.f32.gmra.mxu0 %v1012
        %v1080 = vpop.f32.mrf.mxu0
        %v1081 = vadd.f32 0.0, %v1080
        %v1082 = vpop.f32.mrf.mxu0
        %1083 = vdwg.mxu0
        %v1085 = vrot.slane %v1081, 2
        %1086 = vrot.lane.b32.xlu0 %v1085, 8
        %v1087 = vpop.permute.xlu0 %1086
        %v1089 = vrot.slane %v1081, 4
        %1090 = vrot.lane.b32.xlu0 %v1089, 16
        %v1091 = vpop.permute.xlu0 %1090
        %v1093 = vrot.slane %v1081, 6
        %1094 = vrot.lane.b32.xlu0 %v1093, 24
        %v1095 = vpop.permute.xlu0 %1094
        %v1097 = vsel %vm922, %v1081, %v1087
        %vm1098 = vcmask 130048
        %v1099 = vsel %vm1098, %v1097, %v1091
        %vm1100 = vcmask 195584
        %v1101 = vsel %vm1100, %v1099, %v1095
        %1103 = vrot.lane.b32.xlu0 %v706, 120
        %v1104 = vpop.permute.xlu0 %1103
        %1106 = vrot.lane.b32.xlu0 %v872, 112
        %v1107 = vpop.permute.xlu0 %1106
        %1109 = vrot.lane.b32.xlu0 %v876, 104
        %v1110 = vpop.permute.xlu0 %1109
        %v1112 = vsel %vm884, %v880, %v1104
        %v1113 = vsel %vm886, %v1112, %v1107
        %v1114 = vsel %vm888, %v1113, %v1110
        %1116 = vrot.lane.b32.xlu0 %v787, 120
        %v1117 = vpop.permute.xlu0 %1116
        %1119 = vrot.lane.b32.xlu0 %v891, 112
        %v1120 = vpop.permute.xlu0 %1119
        %1122 = vrot.lane.b32.xlu0 %v895, 104
        %v1123 = vpop.permute.xlu0 %1122
        %v1125 = vsel %vm884, %v899, %v1117
        %v1126 = vsel %vm886, %v1125, %v1120
        %v1127 = vsel %vm888, %v1126, %v1123
        %1129 = vrot.lane.b32.xlu0 %v868, 120
        %v1130 = vpop.permute.xlu0 %1129
        %1132 = vrot.lane.b32.xlu0 %v907, 112
        %v1133 = vpop.permute.xlu0 %1132
        %1135 = vrot.lane.b32.xlu0 %v911, 104
        %v1136 = vpop.permute.xlu0 %1135
        %v1138 = vsel %vm884, %v915, %v1130
        %v1139 = vsel %vm886, %v1138, %v1133
        %v1140 = vsel %vm888, %v1139, %v1136
        %v1142 = vsel %vm922, %v1114, 0
        %v1145 = vsel %vm922, %v1127, 0
        %1147 = vmatprep.subr.mxu0 0.0
        %1148 = vmatpush1.xpose.msra.mxu0 0.0
        %1149 = vmatprep.subr.mxu0 0.0
        %1150 = vmatpush1.xpose.msra.mxu0 0.0
        %1151 = vmatprep.subr.mxu0 0.0
        %1152 = vmatpush1.xpose.msra.mxu0 0.0
        %1153 = vmatprep.subr.mxu0 0.0
        %1154 = vmatpush1.xpose.msra.mxu0 0.0
        %1155 = vmatprep.subr.mxu0 0.0
        %1156 = vmatpush1.xpose.msra.mxu0 0.0
        %1157 = vmatprep.subr.mxu0 0.0
        %1158 = vmatpush1.xpose.msra.mxu0 0.0
        %1159 = vmatprep.subr.mxu0 0.0
        %1160 = vmatpush1.xpose.msra.mxu0 0.0
        %1161 = vmatprep.subr.mxu0 0.0
        %1162 = vmatpush1.xpose.msra.mxu0 0.0
        %1163 = vmatprep.subr.mxu0 0.0
        %1164 = vmatpush1.xpose.msra.mxu0 0.0
        %1165 = vmatprep.subr.mxu0 0.0
        %1166 = vmatpush1.xpose.msra.mxu0 0.0
        %1167 = vmatprep.subr.mxu0 0.0
        %1168 = vmatpush1.xpose.msra.mxu0 0.0
        %1169 = vmatprep.subr.mxu0 0.0
        %1170 = vmatpush1.xpose.msra.mxu0 0.0
        %1171 = vmatprep.subr.mxu0 0.0
        %1172 = vmatpush1.xpose.msra.mxu0 0.0
        %1173 = vmatprep.subr.mxu0 0.0
        %1174 = vmatpush1.xpose.msra.mxu0 0.0
        %1175 = vmatprep.subr.mxu0 0.0
        %1176 = vmatpush1.xpose.msra.mxu0 0.0
        %1177 = vmatprep.subr.mxu0 0.0
        %1178 = vmatpush1.xpose.msra.mxu0 %v1145
        %1179 = vmatprep.subr.mxu0 0.0
        %1180 = vmatpush2.xpose.msra.mxu0 0.0
        %1181 = vmatprep.subr.mxu0 0.0
        %1182 = vmatpush2.xpose.msra.mxu0 0.0
        %1183 = vmatprep.subr.mxu0 0.0
        %1184 = vmatpush2.xpose.msra.mxu0 0.0
        %1185 = vmatprep.subr.mxu0 0.0
        %1186 = vmatpush2.xpose.msra.mxu0 0.0
        %1187 = vmatprep.subr.mxu0 0.0
        %1188 = vmatpush2.xpose.msra.mxu0 0.0
        %1189 = vmatprep.subr.mxu0 0.0
        %1190 = vmatpush2.xpose.msra.mxu0 0.0
        %1191 = vmatprep.subr.mxu0 0.0
        %1192 = vmatpush2.xpose.msra.mxu0 0.0
        %1193 = vmatprep.subr.mxu0 0.0
        %1194 = vmatpush2.xpose.msra.mxu0 0.0
        %1195 = vmatprep.subr.mxu0 0.0
        %1196 = vmatpush2.xpose.msra.mxu0 0.0
        %1197 = vmatprep.subr.mxu0 0.0
        %1198 = vmatpush2.xpose.msra.mxu0 0.0
        %1199 = vmatprep.subr.mxu0 0.0
        %1200 = vmatpush2.xpose.msra.mxu0 0.0
        %1201 = vmatprep.subr.mxu0 0.0
        %1202 = vmatpush2.xpose.msra.mxu0 0.0
        %1203 = vmatprep.subr.mxu0 0.0
        %1204 = vmatpush2.xpose.msra.mxu0 0.0
        %1205 = vmatprep.subr.mxu0 0.0
        %1206 = vmatpush2.xpose.msra.mxu0 0.0
        %1207 = vmatprep.subr.mxu0 0.0
        %1208 = vmatpush2.xpose.msra.mxu0 0.0
        %1209 = vmatprep.subr.mxu0 0.0
        %1210 = vmatpush2.xpose.msra.mxu0 0.0
        %1211 = vmatprep.mubr.f32.mxu0 0.0
        %1212 = vmatmul.mubr.f32.gmra.mxu0 %v1142
        %v1213 = vpop.f32.mrf.mxu0
        %v1214 = vadd.f32 0.0, %v1213
        %v1215 = vpop.f32.mrf.mxu0
        %1216 = vdwg.mxu0
        %v1217 = vmul.f32 %v1214, 0.35355338
        %v1218 = vsel %vm922, %v1217, -inf
        %1219 = vmax.xlane.f32.xlu0 %v1218
        %v1220 = vpop.xlane.xlu0 %1219
        %v1221 = vsub.f32 %v1217, %v1220
        %v1222 = vmul.f32 %v1221, 1.442695
        %v1223 = vpow.pop %v1222
        %v1224 = vsel %vm922, %v1223, 0.0
        %1225 = vadd.xlane.f32.xlu0 %v1224
        %v1226 = vpop.xlane.xlu0 %1225
        %v1227 = vrcp.pop %v1226
        %v1228 = vmul.f32 %v1223, %v1227
        %v1230 = vsel %vm922, %v1228, 0
        %1232 = vmatprep.subr.mxu0 0.0
        %1233 = vmatpush1.msra.mxu0 0.0
        %1234 = vmatprep.subr.mxu0 0.0
        %1235 = vmatpush1.msra.mxu0 0.0
        %1236 = vmatprep.subr.mxu0 0.0
        %1237 = vmatpush1.msra.mxu0 0.0
        %1238 = vmatprep.subr.mxu0 0.0
        %1239 = vmatpush1.msra.mxu0 0.0
        %1240 = vmatprep.subr.mxu0 0.0
        %1241 = vmatpush1.msra.mxu0 0.0
        %1242 = vmatprep.subr.mxu0 0.0
        %1243 = vmatpush1.msra.mxu0 0.0
        %1244 = vmatprep.subr.mxu0 0.0
        %1245 = vmatpush1.msra.mxu0 0.0
        %1246 = vmatprep.subr.mxu0 0.0
        %1247 = vmatpush1.msra.mxu0 0.0
        %1248 = vmatprep.subr.mxu0 0.0
        %1249 = vmatpush1.msra.mxu0 0.0
        %1250 = vmatprep.subr.mxu0 0.0
        %1251 = vmatpush1.msra.mxu0 0.0
        %1252 = vmatprep.subr.mxu0 0.0
        %1253 = vmatpush1.msra.mxu0 0.0
        %1254 = vmatprep.subr.mxu0 0.0
        %1255 = vmatpush1.msra.mxu0 0.0
        %1256 = vmatprep.subr.mxu0 0.0
        %1257 = vmatpush1.msra.mxu0 0.0
        %1258 = vmatprep.subr.mxu0 0.0
        %1259 = vmatpush1.msra.mxu0 0.0
        %1260 = vmatprep.subr.mxu0 0.0
        %1261 = vmatpush1.msra.mxu0 0.0
        %1262 = vmatprep.subr.mxu0 0.0
        %1263 = vmatpush1.msra.mxu0 %v1140
        %1264 = vmatprep.subr.mxu0 0.0
        %1265 = vmatpush2.msra.mxu0 0.0
        %1266 = vmatprep.subr.mxu0 0.0
        %1267 = vmatpush2.msra.mxu0 0.0
        %1268 = vmatprep.subr.mxu0 0.0
        %1269 = vmatpush2.msra.mxu0 0.0
        %1270 = vmatprep.subr.mxu0 0.0
        %1271 = vmatpush2.msra.mxu0 0.0
        %1272 = vmatprep.subr.mxu0 0.0
        %1273 = vmatpush2.msra.mxu0 0.0
        %1274 = vmatprep.subr.mxu0 0.0
        %1275 = vmatpush2.msra.mxu0 0.0
        %1276 = vmatprep.subr.mxu0 0.0
        %1277 = vmatpush2.msra.mxu0 0.0
        %1278 = vmatprep.subr.mxu0 0.0
        %1279 = vmatpush2.msra.mxu0 0.0
        %1280 = vmatprep.subr.mxu0 0.0
        %1281 = vmatpush2.msra.mxu0 0.0
        %1282 = vmatprep.subr.mxu0 0.0
        %1283 = vmatpush2.msra.mxu0 0.0
        %1284 = vmatprep.subr.mxu0 0.0
        %1285 = vmatpush2.msra.mxu0 0.0
        %1286 = vmatprep.subr.mxu0 0.0
        %1287 = vmatpush2.msra.mxu0 0.0
        %1288 = vmatprep.subr.mxu0 0.0
        %1289 = vmatpush2.msra.mxu0 0.0
        %1290 = vmatprep.subr.mxu0 0.0
        %1291 = vmatpush2.msra.mxu0 0.0
        %1292 = vmatprep.subr.mxu0 0.0
        %1293 = vmatpush2.msra.mxu0 0.0
        %1294 = vmatprep.subr.mxu0 0.0
        %1295 = vmatpush2.msra.mxu0 0.0
        %1296 = vmatprep.mubr.f32.mxu0 0.0
        %1297 = vmatmul.mubr.f32.gmra.mxu0 %v1230
        %v1298 = vpop.f32.mrf.mxu0
        %v1299 = vadd.f32 0.0, %v1298
        %v1300 = vpop.f32.mrf.mxu0
        %1301 = vdwg.mxu0
        %v1303 = vrot.slane %v1299, 2
        %1304 = vrot.lane.b32.xlu0 %v1303, 8
        %v1305 = vpop.permute.xlu0 %1304
        %v1307 = vrot.slane %v1299, 4
        %1308 = vrot.lane.b32.xlu0 %v1307, 16
        %v1309 = vpop.permute.xlu0 %1308
        %v1311 = vrot.slane %v1299, 6
        %1312 = vrot.lane.b32.xlu0 %v1311, 24
        %v1313 = vpop.permute.xlu0 %1312
        %v1315 = vsel %vm922, %v1299, %v1305
        %v1316 = vsel %vm1098, %v1315, %v1309
        %v1317 = vsel %vm1100, %v1316, %v1313
        %1319 = vrot.lane.b32.xlu0 %v880, 120
        %v1320 = vpop.permute.xlu0 %1319
        %1322 = vrot.lane.b32.xlu0 %v706, 112
        %v1323 = vpop.permute.xlu0 %1322
        %1325 = vrot.lane.b32.xlu0 %v872, 104
        %v1326 = vpop.permute.xlu0 %1325
        %v1328 = vsel %vm884, %v876, %v1320
        %v1329 = vsel %vm886, %v1328, %v1323
        %v1330 = vsel %vm888, %v1329, %v1326
        %1332 = vrot.lane.b32.xlu0 %v899, 120
        %v1333 = vpop.permute.xlu0 %1332
        %1335 = vrot.lane.b32.xlu0 %v787, 112
        %v1336 = vpop.permute.xlu0 %1335
        %1338 = vrot.lane.b32.xlu0 %v891, 104
        %v1339 = vpop.permute.xlu0 %1338
        %v1341 = vsel %vm884, %v895, %v1333
        %v1342 = vsel %vm886, %v1341, %v1336
        %v1343 = vsel %vm888, %v1342, %v1339
        %1345 = vrot.lane.b32.xlu0 %v915, 120
        %v1346 = vpop.permute.xlu0 %1345
        %1348 = vrot.lane.b32.xlu0 %v868, 112
        %v1349 = vpop.permute.xlu0 %1348
        %1351 = vrot.lane.b32.xlu0 %v907, 104
        %v1352 = vpop.permute.xlu0 %1351
        %v1354 = vsel %vm884, %v911, %v1346
        %v1355 = vsel %vm886, %v1354, %v1349
        %v1356 = vsel %vm888, %v1355, %v1352
        %v1358 = vsel %vm922, %v1330, 0
        %v1361 = vsel %vm922, %v1343, 0
        %1363 = vmatprep.subr.mxu0 0.0
        %1364 = vmatpush1.xpose.msra.mxu0 0.0
        %1365 = vmatprep.subr.mxu0 0.0
        %1366 = vmatpush1.xpose.msra.mxu0 0.0
        %1367 = vmatprep.subr.mxu0 0.0
        %1368 = vmatpush1.xpose.msra.mxu0 0.0
        %1369 = vmatprep.subr.mxu0 0.0
        %1370 = vmatpush1.xpose.msra.mxu0 0.0
        %1371 = vmatprep.subr.mxu0 0.0
        %1372 = vmatpush1.xpose.msra.mxu0 0.0
        %1373 = vmatprep.subr.mxu0 0.0
        %1374 = vmatpush1.xpose.msra.mxu0 0.0
        %1375 = vmatprep.subr.mxu0 0.0
        %1376 = vmatpush1.xpose.msra.mxu0 0.0
        %1377 = vmatprep.subr.mxu0 0.0
        %1378 = vmatpush1.xpose.msra.mxu0 0.0
        %1379 = vmatprep.subr.mxu0 0.0
        %1380 = vmatpush1.xpose.msra.mxu0 0.0
        %1381 = vmatprep.subr.mxu0 0.0
        %1382 = vmatpush1.xpose.msra.mxu0 0.0
        %1383 = vmatprep.subr.mxu0 0.0
        %1384 = vmatpush1.xpose.msra.mxu0 0.0
        %1385 = vmatprep.subr.mxu0 0.0
        %1386 = vmatpush1.xpose.msra.mxu0 0.0
        %1387 = vmatprep.subr.mxu0 0.0
        %1388 = vmatpush1.xpose.msra.mxu0 0.0
        %1389 = vmatprep.subr.mxu0 0.0
        %1390 = vmatpush1.xpose.msra.mxu0 0.0
        %1391 = vmatprep.subr.mxu0 0.0
        %1392 = vmatpush1.xpose.msra.mxu0 0.0
        %1393 = vmatprep.subr.mxu0 0.0
        %1394 = vmatpush1.xpose.msra.mxu0 %v1361
        %1395 = vmatprep.subr.mxu0 0.0
        %1396 = vmatpush2.xpose.msra.mxu0 0.0
        %1397 = vmatprep.subr.mxu0 0.0
        %1398 = vmatpush2.xpose.msra.mxu0 0.0
        %1399 = vmatprep.subr.mxu0 0.0
        %1400 = vmatpush2.xpose.msra.mxu0 0.0
        %1401 = vmatprep.subr.mxu0 0.0
        %1402 = vmatpush2.xpose.msra.mxu0 0.0
        %1403 = vmatprep.subr.mxu0 0.0
        %1404 = vmatpush2.xpose.msra.mxu0 0.0
        %1405 = vmatprep.subr.mxu0 0.0
        %1406 = vmatpush2.xpose.msra.mxu0 0.0
        %1407 = vmatprep.subr.mxu0 0.0
        %1408 = vmatpush2.xpose.msra.mxu0 0.0
        %1409 = vmatprep.subr.mxu0 0.0
        %1410 = vmatpush2.xpose.msra.mxu0 0.0
        %1411 = vmatprep.subr.mxu0 0.0
        %1412 = vmatpush2.xpose.msra.mxu0 0.0
        %1413 = vmatprep.subr.mxu0 0.0
        %1414 = vmatpush2.xpose.msra.mxu0 0.0
        %1415 = vmatprep.subr.mxu0 0.0
        %1416 = vmatpush2.xpose.msra.mxu0 0.0
        %1417 = vmatprep.subr.mxu0 0.0
        %1418 = vmatpush2.xpose.msra.mxu0 0.0
        %1419 = vmatprep.subr.mxu0 0.0
        %1420 = vmatpush2.xpose.msra.mxu0 0.0
        %1421 = vmatprep.subr.mxu0 0.0
        %1422 = vmatpush2.xpose.msra.mxu0 0.0
        %1423 = vmatprep.subr.mxu0 0.0
        %1424 = vmatpush2.xpose.msra.mxu0 0.0
        %1425 = vmatprep.subr.mxu0 0.0
        %1426 = vmatpush2.xpose.msra.mxu0 0.0
        %1427 = vmatprep.mubr.f32.mxu0 0.0
        %1428 = vmatmul.mubr.f32.gmra.mxu0 %v1358
        %v1429 = vpop.f32.mrf.mxu0
        %v1430 = vadd.f32 0.0, %v1429
        %v1431 = vpop.f32.mrf.mxu0
        %1432 = vdwg.mxu0
        %v1433 = vmul.f32 %v1430, 0.35355338
        %v1434 = vsel %vm922, %v1433, -inf
        %1435 = vmax.xlane.f32.xlu0 %v1434
        %v1436 = vpop.xlane.xlu0 %1435
        %v1437 = vsub.f32 %v1433, %v1436
        %v1438 = vmul.f32 %v1437, 1.442695
        %v1439 = vpow.pop %v1438
        %v1440 = vsel %vm922, %v1439, 0.0
        %1441 = vadd.xlane.f32.xlu0 %v1440
        %v1442 = vpop.xlane.xlu0 %1441
        %v1443 = vrcp.pop %v1442
        %v1444 = vmul.f32 %v1439, %v1443
        %v1446 = vsel %vm922, %v1444, 0
        %1448 = vmatprep.subr.mxu0 0.0
        %1449 = vmatpush1.msra.mxu0 0.0
        %1450 = vmatprep.subr.mxu0 0.0
        %1451 = vmatpush1.msra.mxu0 0.0
        %1452 = vmatprep.subr.mxu0 0.0
        %1453 = vmatpush1.msra.mxu0 0.0
        %1454 = vmatprep.subr.mxu0 0.0
        %1455 = vmatpush1.msra.mxu0 0.0
        %1456 = vmatprep.subr.mxu0 0.0
        %1457 = vmatpush1.msra.mxu0 0.0
        %1458 = vmatprep.subr.mxu0 0.0
        %1459 = vmatpush1.msra.mxu0 0.0
        %1460 = vmatprep.subr.mxu0 0.0
        %1461 = vmatpush1.msra.mxu0 0.0
        %1462 = vmatprep.subr.mxu0 0.0
        %1463 = vmatpush1.msra.mxu0 0.0
        %1464 = vmatprep.subr.mxu0 0.0
        %1465 = vmatpush1.msra.mxu0 0.0
        %1466 = vmatprep.subr.mxu0 0.0
        %1467 = vmatpush1.msra.mxu0 0.0
        %1468 = vmatprep.subr.mxu0 0.0
        %1469 = vmatpush1.msra.mxu0 0.0
        %1470 = vmatprep.subr.mxu0 0.0
        %1471 = vmatpush1.msra.mxu0 0.0
        %1472 = vmatprep.subr.mxu0 0.0
        %1473 = vmatpush1.msra.mxu0 0.0
        %1474 = vmatprep.subr.mxu0 0.0
        %1475 = vmatpush1.msra.mxu0 0.0
        %1476 = vmatprep.subr.mxu0 0.0
        %1477 = vmatpush1.msra.mxu0 0.0
        %1478 = vmatprep.subr.mxu0 0.0
        %1479 = vmatpush1.msra.mxu0 %v1356
        %1480 = vmatprep.subr.mxu0 0.0
        %1481 = vmatpush2.msra.mxu0 0.0
        %1482 = vmatprep.subr.mxu0 0.0
        %1483 = vmatpush2.msra.mxu0 0.0
        %1484 = vmatprep.subr.mxu0 0.0
        %1485 = vmatpush2.msra.mxu0 0.0
        %1486 = vmatprep.subr.mxu0 0.0
        %1487 = vmatpush2.msra.mxu0 0.0
        %1488 = vmatprep.subr.mxu0 0.0
        %1489 = vmatpush2.msra.mxu0 0.0
        %1490 = vmatprep.subr.mxu0 0.0
        %1491 = vmatpush2.msra.mxu0 0.0
        %1492 = vmatprep.subr.mxu0 0.0
        %1493 = vmatpush2.msra.mxu0 0.0
        %1494 = vmatprep.subr.mxu0 0.0
        %1495 = vmatpush2.msra.mxu0 0.0
        %1496 = vmatprep.subr.mxu0 0.0
        %1497 = vmatpush2.msra.mxu0 0.0
        %1498 = vmatprep.subr.mxu0 0.0
        %1499 = vmatpush2.msra.mxu0 0.0
        %1500 = vmatprep.subr.mxu0 0.0
        %1501 = vmatpush2.msra.mxu0 0.0
        %1502 = vmatprep.subr.mxu0 0.0
        %1503 = vmatpush2.msra.mxu0 0.0
        %1504 = vmatprep.subr.mxu0 0.0
        %1505 = vmatpush2.msra.mxu0 0.0
        %1506 = vmatprep.subr.mxu0 0.0
        %1507 = vmatpush2.msra.mxu0 0.0
        %1508 = vmatprep.subr.mxu0 0.0
        %1509 = vmatpush2.msra.mxu0 0.0
        %1510 = vmatprep.subr.mxu0 0.0
        %1511 = vmatpush2.msra.mxu0 0.0
        %1512 = vmatprep.mubr.f32.mxu0 0.0
        %1513 = vmatmul.mubr.f32.gmra.mxu0 %v1446
        %v1514 = vpop.f32.mrf.mxu0
        %v1515 = vadd.f32 0.0, %v1514
        %v1516 = vpop.f32.mrf.mxu0
        %1517 = vdwg.mxu0
        %v1519 = vrot.slane %v1515, 2
        %1520 = vrot.lane.b32.xlu0 %v1519, 8
        %v1521 = vpop.permute.xlu0 %1520
        %v1523 = vrot.slane %v1515, 4
        %1524 = vrot.lane.b32.xlu0 %v1523, 16
        %v1525 = vpop.permute.xlu0 %1524
        %v1527 = vrot.slane %v1515, 6
        %1528 = vrot.lane.b32.xlu0 %v1527, 24
        %v1529 = vpop.permute.xlu0 %1528
        %v1531 = vsel %vm922, %v1515, %v1521
        %v1532 = vsel %vm1098, %v1531, %v1525
        %v1533 = vsel %vm1100, %v1532, %v1529
        %1535 = vrot.lane.b32.xlu0 %v876, 120
        %v1536 = vpop.permute.xlu0 %1535
        %1538 = vrot.lane.b32.xlu0 %v880, 112
        %v1539 = vpop.permute.xlu0 %1538
        %1541 = vrot.lane.b32.xlu0 %v706, 104
        %v1542 = vpop.permute.xlu0 %1541
        %v1544 = vsel %vm884, %v872, %v1536
        %v1545 = vsel %vm886, %v1544, %v1539
        %v1546 = vsel %vm888, %v1545, %v1542
        %1548 = vrot.lane.b32.xlu0 %v895, 120
        %v1549 = vpop.permute.xlu0 %1548
        %1551 = vrot.lane.b32.xlu0 %v899, 112
        %v1552 = vpop.permute.xlu0 %1551
        %1554 = vrot.lane.b32.xlu0 %v787, 104
        %v1555 = vpop.permute.xlu0 %1554
        %v1557 = vsel %vm884, %v891, %v1549
        %v1558 = vsel %vm886, %v1557, %v1552
        %v1559 = vsel %vm888, %v1558, %v1555
        %1561 = vrot.lane.b32.xlu0 %v911, 120
        %v1562 = vpop.permute.xlu0 %1561
        %1564 = vrot.lane.b32.xlu0 %v915, 112
        %v1565 = vpop.permute.xlu0 %1564
        %1567 = vrot.lane.b32.xlu0 %v868, 104
        %v1568 = vpop.permute.xlu0 %1567
        %v1570 = vsel %vm884, %v907, %v1562
        %v1571 = vsel %vm886, %v1570, %v1565
        %v1572 = vsel %vm888, %v1571, %v1568
        %v1574 = vsel %vm922, %v1546, 0
        %v1577 = vsel %vm922, %v1559, 0
        %1579 = vmatprep.subr.mxu0 0.0
        %1580 = vmatpush1.xpose.msra.mxu0 0.0
        %1581 = vmatprep.subr.mxu0 0.0
        %1582 = vmatpush1.xpose.msra.mxu0 0.0
        %1583 = vmatprep.subr.mxu0 0.0
        %1584 = vmatpush1.xpose.msra.mxu0 0.0
        %1585 = vmatprep.subr.mxu0 0.0
        %1586 = vmatpush1.xpose.msra.mxu0 0.0
        %1587 = vmatprep.subr.mxu0 0.0
        %1588 = vmatpush1.xpose.msra.mxu0 0.0
        %1589 = vmatprep.subr.mxu0 0.0
        %1590 = vmatpush1.xpose.msra.mxu0 0.0
        %1591 = vmatprep.subr.mxu0 0.0
        %1592 = vmatpush1.xpose.msra.mxu0 0.0
        %1593 = vmatprep.subr.mxu0 0.0
        %1594 = vmatpush1.xpose.msra.mxu0 0.0
        %1595 = vmatprep.subr.mxu0 0.0
        %1596 = vmatpush1.xpose.msra.mxu0 0.0
        %1597 = vmatprep.subr.mxu0 0.0
        %1598 = vmatpush1.xpose.msra.mxu0 0.0
        %1599 = vmatprep.subr.mxu0 0.0
        %1600 = vmatpush1.xpose.msra.mxu0 0.0
        %1601 = vmatprep.subr.mxu0 0.0
        %1602 = vmatpush1.xpose.msra.mxu0 0.0
        %1603 = vmatprep.subr.mxu0 0.0
        %1604 = vmatpush1.xpose.msra.mxu0 0.0
        %1605 = vmatprep.subr.mxu0 0.0
        %1606 = vmatpush1.xpose.msra.mxu0 0.0
        %1607 = vmatprep.subr.mxu0 0.0
        %1608 = vmatpush1.xpose.msra.mxu0 0.0
        %1609 = vmatprep.subr.mxu0 0.0
        %1610 = vmatpush1.xpose.msra.mxu0 %v1577
        %1611 = vmatprep.subr.mxu0 0.0
        %1612 = vmatpush2.xpose.msra.mxu0 0.0
        %1613 = vmatprep.subr.mxu0 0.0
        %1614 = vmatpush2.xpose.msra.mxu0 0.0
        %1615 = vmatprep.subr.mxu0 0.0
        %1616 = vmatpush2.xpose.msra.mxu0 0.0
        %1617 = vmatprep.subr.mxu0 0.0
        %1618 = vmatpush2.xpose.msra.mxu0 0.0
        %1619 = vmatprep.subr.mxu0 0.0
        %1620 = vmatpush2.xpose.msra.mxu0 0.0
        %1621 = vmatprep.subr.mxu0 0.0
        %1622 = vmatpush2.xpose.msra.mxu0 0.0
        %1623 = vmatprep.subr.mxu0 0.0
        %1624 = vmatpush2.xpose.msra.mxu0 0.0
        %1625 = vmatprep.subr.mxu0 0.0
        %1626 = vmatpush2.xpose.msra.mxu0 0.0
        %1627 = vmatprep.subr.mxu0 0.0
        %1628 = vmatpush2.xpose.msra.mxu0 0.0
        %1629 = vmatprep.subr.mxu0 0.0
        %1630 = vmatpush2.xpose.msra.mxu0 0.0
        %1631 = vmatprep.subr.mxu0 0.0
        %1632 = vmatpush2.xpose.msra.mxu0 0.0
        %1633 = vmatprep.subr.mxu0 0.0
        %1634 = vmatpush2.xpose.msra.mxu0 0.0
        %1635 = vmatprep.subr.mxu0 0.0
        %1636 = vmatpush2.xpose.msra.mxu0 0.0
        %1637 = vmatprep.subr.mxu0 0.0
        %1638 = vmatpush2.xpose.msra.mxu0 0.0
        %1639 = vmatprep.subr.mxu0 0.0
        %1640 = vmatpush2.xpose.msra.mxu0 0.0
        %1641 = vmatprep.subr.mxu0 0.0
        %1642 = vmatpush2.xpose.msra.mxu0 0.0
        %1643 = vmatprep.mubr.f32.mxu0 0.0
        %1644 = vmatmul.mubr.f32.gmra.mxu0 %v1574
        %v1645 = vpop.f32.mrf.mxu0
        %v1646 = vadd.f32 0.0, %v1645
        %v1647 = vpop.f32.mrf.mxu0
        %1648 = vdwg.mxu0
        %v1649 = vmul.f32 %v1646, 0.35355338
        %v1650 = vsel %vm922, %v1649, -inf
        %1651 = vmax.xlane.f32.xlu0 %v1650
        %v1652 = vpop.xlane.xlu0 %1651
        %v1653 = vsub.f32 %v1649, %v1652
        %v1654 = vmul.f32 %v1653, 1.442695
        %v1655 = vpow.pop %v1654
        %v1656 = vsel %vm922, %v1655, 0.0
        %1657 = vadd.xlane.f32.xlu0 %v1656
        %v1658 = vpop.xlane.xlu0 %1657
        %v1659 = vrcp.pop %v1658
        %v1660 = vmul.f32 %v1655, %v1659
        %v1662 = vsel %vm922, %v1660, 0
        %1664 = vmatprep.subr.mxu0 0.0
        %1665 = vmatpush1.msra.mxu0 0.0
        %1666 = vmatprep.subr.mxu0 0.0
        %1667 = vmatpush1.msra.mxu0 0.0
        %1668 = vmatprep.subr.mxu0 0.0
        %1669 = vmatpush1.msra.mxu0 0.0
        %1670 = vmatprep.subr.mxu0 0.0
        %1671 = vmatpush1.msra.mxu0 0.0
        %1672 = vmatprep.subr.mxu0 0.0
        %1673 = vmatpush1.msra.mxu0 0.0
        %1674 = vmatprep.subr.mxu0 0.0
        %1675 = vmatpush1.msra.mxu0 0.0
        %1676 = vmatprep.subr.mxu0 0.0
        %1677 = vmatpush1.msra.mxu0 0.0
        %1678 = vmatprep.subr.mxu0 0.0
        %1679 = vmatpush1.msra.mxu0 0.0
        %1680 = vmatprep.subr.mxu0 0.0
        %1681 = vmatpush1.msra.mxu0 0.0
        %1682 = vmatprep.subr.mxu0 0.0
        %1683 = vmatpush1.msra.mxu0 0.0
        %1684 = vmatprep.subr.mxu0 0.0
        %1685 = vmatpush1.msra.mxu0 0.0
        %1686 = vmatprep.subr.mxu0 0.0
        %1687 = vmatpush1.msra.mxu0 0.0
        %1688 = vmatprep.subr.mxu0 0.0
        %1689 = vmatpush1.msra.mxu0 0.0
        %1690 = vmatprep.subr.mxu0 0.0
        %1691 = vmatpush1.msra.mxu0 0.0
        %1692 = vmatprep.subr.mxu0 0.0
        %1693 = vmatpush1.msra.mxu0 0.0
        %1694 = vmatprep.subr.mxu0 0.0
        %1695 = vmatpush1.msra.mxu0 %v1572
        %1696 = vmatprep.subr.mxu0 0.0
        %1697 = vmatpush2.msra.mxu0 0.0
        %1698 = vmatprep.subr.mxu0 0.0
        %1699 = vmatpush2.msra.mxu0 0.0
        %1700 = vmatprep.subr.mxu0 0.0
        %1701 = vmatpush2.msra.mxu0 0.0
        %1702 = vmatprep.subr.mxu0 0.0
        %1703 = vmatpush2.msra.mxu0 0.0
        %1704 = vmatprep.subr.mxu0 0.0
        %1705 = vmatpush2.msra.mxu0 0.0
        %1706 = vmatprep.subr.mxu0 0.0
        %1707 = vmatpush2.msra.mxu0 0.0
        %1708 = vmatprep.subr.mxu0 0.0
        %1709 = vmatpush2.msra.mxu0 0.0
        %1710 = vmatprep.subr.mxu0 0.0
        %1711 = vmatpush2.msra.mxu0 0.0
        %1712 = vmatprep.subr.mxu0 0.0
        %1713 = vmatpush2.msra.mxu0 0.0
        %1714 = vmatprep.subr.mxu0 0.0
        %1715 = vmatpush2.msra.mxu0 0.0
        %1716 = vmatprep.subr.mxu0 0.0
        %1717 = vmatpush2.msra.mxu0 0.0
        %1718 = vmatprep.subr.mxu0 0.0
        %1719 = vmatpush2.msra.mxu0 0.0
        %1720 = vmatprep.subr.mxu0 0.0
        %1721 = vmatpush2.msra.mxu0 0.0
        %1722 = vmatprep.subr.mxu0 0.0
        %1723 = vmatpush2.msra.mxu0 0.0
        %1724 = vmatprep.subr.mxu0 0.0
        %1725 = vmatpush2.msra.mxu0 0.0
        %1726 = vmatprep.subr.mxu0 0.0
        %1727 = vmatpush2.msra.mxu0 0.0
        %1728 = vmatprep.mubr.f32.mxu0 0.0
        %1729 = vmatmul.mubr.f32.gmra.mxu0 %v1662
        %v1730 = vpop.f32.mrf.mxu0
        %v1731 = vadd.f32 0.0, %v1730
        %v1732 = vpop.f32.mrf.mxu0
        %1733 = vdwg.mxu0
        %v1735 = vrot.slane %v1731, 2
        %1736 = vrot.lane.b32.xlu0 %v1735, 8
        %v1737 = vpop.permute.xlu0 %1736
        %v1739 = vrot.slane %v1731, 4
        %1740 = vrot.lane.b32.xlu0 %v1739, 16
        %v1741 = vpop.permute.xlu0 %1740
        %v1743 = vrot.slane %v1731, 6
        %1744 = vrot.lane.b32.xlu0 %v1743, 24
        %v1745 = vpop.permute.xlu0 %1744
        %v1747 = vsel %vm922, %v1731, %v1737
        %v1748 = vsel %vm1098, %v1747, %v1741
        %v1749 = vsel %vm1100, %v1748, %v1745
        %v1751 = vrot.slane %v1317, 6
        %v1754 = vrot.slane %v1533, 4
        %v1757 = vrot.slane %v1749, 2
        %v1759 = vsel %vm884, %v1101, %v1751
        %v1760 = vsel %vm886, %v1759, %v1754
        %v1761 = vsel %vm888, %v1760, %v1757
        %v1762 = vld [vmem:[#allocation5] sm:$0xff]
        %v1763 = vld [vmem:[#allocation5 + $0x8] sm:$0xff]
        %v1764 = vld [vmem:[#allocation5 + $0x10] sm:$0xff]
        %v1765 = vld [vmem:[#allocation5 + $0x18] sm:$0xff]
        %v1767 = vsel %vm596, %v1761, 0
        %1769 = vmatprep.subr.mxu0 0.0
        %1770 = vmatpush1.msra.mxu0 0.0
        %1771 = vmatprep.subr.mxu0 0.0
        %1772 = vmatpush1.msra.mxu0 0.0
        %1773 = vmatprep.subr.mxu0 0.0
        %1774 = vmatpush1.msra.mxu0 0.0
        %1775 = vmatprep.subr.mxu0 0.0
        %1776 = vmatpush1.msra.mxu0 0.0
        %1777 = vmatprep.subr.mxu0 0.0
        %1778 = vmatpush1.msra.mxu0 0.0
        %1779 = vmatprep.subr.mxu0 0.0
        %1780 = vmatpush1.msra.mxu0 0.0
        %1781 = vmatprep.subr.mxu0 0.0
        %1782 = vmatpush1.msra.mxu0 0.0
        %1783 = vmatprep.subr.mxu0 0.0
        %1784 = vmatpush1.msra.mxu0 0.0
        %1785 = vmatprep.subr.mxu0 0.0
        %1786 = vmatpush1.msra.mxu0 0.0
        %1787 = vmatprep.subr.mxu0 0.0
        %1788 = vmatpush1.msra.mxu0 0.0
        %1789 = vmatprep.subr.mxu0 0.0
        %1790 = vmatpush1.msra.mxu0 0.0
        %1791 = vmatprep.subr.mxu0 0.0
        %1792 = vmatpush1.msra.mxu0 0.0
        %1793 = vmatprep.subr.mxu0 0.0
        %1794 = vmatpush1.msra.mxu0 %v1765
        %1795 = vmatprep.subr.mxu0 0.0
        %1796 = vmatpush1.msra.mxu0 %v1764
        %1797 = vmatprep.subr.mxu0 0.0
        %1798 = vmatpush1.msra.mxu0 %v1763
        %1799 = vmatprep.subr.mxu0 0.0
        %1800 = vmatpush1.msra.mxu0 %v1762
        %1801 = vmatprep.subr.mxu0 0.0
        %1802 = vmatpush2.msra.mxu0 0.0
        %1803 = vmatprep.subr.mxu0 0.0
        %1804 = vmatpush2.msra.mxu0 0.0
        %1805 = vmatprep.subr.mxu0 0.0
        %1806 = vmatpush2.msra.mxu0 0.0
        %1807 = vmatprep.subr.mxu0 0.0
        %1808 = vmatpush2.msra.mxu0 0.0
        %1809 = vmatprep.subr.mxu0 0.0
        %1810 = vmatpush2.msra.mxu0 0.0
        %1811 = vmatprep.subr.mxu0 0.0
        %1812 = vmatpush2.msra.mxu0 0.0
        %1813 = vmatprep.subr.mxu0 0.0
        %1814 = vmatpush2.msra.mxu0 0.0
        %1815 = vmatprep.subr.mxu0 0.0
        %1816 = vmatpush2.msra.mxu0 0.0
        %1817 = vmatprep.subr.mxu0 0.0
        %1818 = vmatpush2.msra.mxu0 0.0
        %1819 = vmatprep.subr.mxu0 0.0
        %1820 = vmatpush2.msra.mxu0 0.0
        %1821 = vmatprep.subr.mxu0 0.0
        %1822 = vmatpush2.msra.mxu0 0.0
        %1823 = vmatprep.subr.mxu0 0.0
        %1824 = vmatpush2.msra.mxu0 0.0
        %1825 = vmatprep.subr.mxu0 0.0
        %1826 = vmatpush2.msra.mxu0 0.0
        %1827 = vmatprep.subr.mxu0 0.0
        %1828 = vmatpush2.msra.mxu0 0.0
        %1829 = vmatprep.subr.mxu0 0.0
        %1830 = vmatpush2.msra.mxu0 0.0
        %1831 = vmatprep.subr.mxu0 0.0
        %1832 = vmatpush2.msra.mxu0 0.0
        %1833 = vmatprep.mubr.f32.mxu0 0.0
        %1834 = vmatmul.mubr.f32.gmra.mxu0 %v1767
        %v1835 = vpop.f32.mrf.mxu0
        %v1836 = vadd.f32 0.0, %v1835
        %v1837 = vpop.f32.mrf.mxu0
        %1838 = vdwg.mxu0
        %v1839 = vadd.f32 %v593, %v1836
        %v1840 = vld [vmem:[%s10] sm:$0x1]
        %v1842 = vlaneseq
        %v1843 = vshrl.u32 %v1842, 7
        %v1844 = vsub.s32 0, %v1843
        %v1845 = vrot.slane %v1840, %v1844
        %v1847 = vadd.f32 %v1839, %v1845
        %v1848 = vld [vmem:[%s11] sm:$0x1]
        %v1849 = vld [vmem:[%s12] sm:$0x1]
        %v1850 = vsel %vm596, %v1847, 0.0
        %1851 = vadd.xlane.f32.xlu0 %v1850
        %v1852 = vpop.xlane.xlu0 %1851
        %v1853 = vmul.f32 %v1852, %v600
        %v1854 = vsub.f32 %v1847, %v1853
        %v1855 = vmul.f32 %v1854, %v1854
        %v1856 = vsel %vm596, %v1855, 0.0
        %1857 = vadd.xlane.f32.xlu0 %v1856
        %v1858 = vpop.xlane.xlu0 %1857
        %v1859 = vmul.f32 %v1858, %v600
        %v1860 = vadd.f32 %v1859, 1e-05
        %v1861 = vrsqrt.pop %v1860
        %v1862 = vmul.f32 %v1854, %v1861
        %v1864 = vlaneseq
        %v1865 = vshrl.u32 %v1864, 7
        %v1866 = vsub.s32 0, %v1865
        %v1867 = vrot.slane %v1848, %v1866
        %v1869 = vmul.f32 %v1862, %v1867
        %v1871 = vlaneseq
        %v1872 = vshrl.u32 %v1871, 7
        %v1873 = vsub.s32 0, %v1872
        %v1874 = vrot.slane %v1849, %v1873
        %v1876 = vadd.f32 %v1869, %v1874
        %v1877 = vld [vmem:[#allocation7] sm:$0xff]
        %v1878 = vld [vmem:[#allocation7 + $0x8] sm:$0xff]
        %v1879 = vld [vmem:[#allocation7 + $0x10] sm:$0xff]
        %v1880 = vld [vmem:[#allocation7 + $0x18] sm:$0xff]
        %v1881 = vld [vmem:[%s14] sm:$0x1]
        %v1883 = vlaneseq
        %v1884 = vshrl.u32 %v1883, 7
        %v1885 = vsub.s32 0, %v1884
        %v1886 = vrot.slane %v1881, %v1885
        %v1889 = vsel %vm596, %v1876, 0
        %1891 = vmatprep.subr.mxu0 0.0
        %1892 = vmatpush1.msra.mxu0 0.0
        %1893 = vmatprep.subr.mxu0 0.0
        %1894 = vmatpush1.msra.mxu0 0.0
        %1895 = vmatprep.subr.mxu0 0.0
        %1896 = vmatpush1.msra.mxu0 0.0
        %1897 = vmatprep.subr.mxu0 0.0
        %1898 = vmatpush1.msra.mxu0 0.0
        %1899 = vmatprep.subr.mxu0 0.0
        %1900 = vmatpush1.msra.mxu0 0.0
        %1901 = vmatprep.subr.mxu0 0.0
        %1902 = vmatpush1.msra.mxu0 0.0
        %1903 = vmatprep.subr.mxu0 0.0
        %1904 = vmatpush1.msra.mxu0 0.0
        %1905 = vmatprep.subr.mxu0 0.0
        %1906 = vmatpush1.msra.mxu0 0.0
        %1907 = vmatprep.subr.mxu0 0.0
        %1908 = vmatpush1.msra.mxu0 0.0
        %1909 = vmatprep.subr.mxu0 0.0
        %1910 = vmatpush1.msra.mxu0 0.0
        %1911 = vmatprep.subr.mxu0 0.0
        %1912 = vmatpush1.msra.mxu0 0.0
        %1913 = vmatprep.subr.mxu0 0.0
        %1914 = vmatpush1.msra.mxu0 0.0
        %1915 = vmatprep.subr.mxu0 0.0
        %1916 = vmatpush1.msra.mxu0 %v1880
        %1917 = vmatprep.subr.mxu0 0.0
        %1918 = vmatpush1.msra.mxu0 %v1879
        %1919 = vmatprep.subr.mxu0 0.0
        %1920 = vmatpush1.msra.mxu0 %v1878
        %1921 = vmatprep.subr.mxu0 0.0
        %1922 = vmatpush1.msra.mxu0 %v1877
        %1923 = vmatprep.subr.mxu0 0.0
        %1924 = vmatpush2.msra.mxu0 0.0
        %1925 = vmatprep.subr.mxu0 0.0
        %1926 = vmatpush2.msra.mxu0 0.0
        %1927 = vmatprep.subr.mxu0 0.0
        %1928 = vmatpush2.msra.mxu0 0.0
        %1929 = vmatprep.subr.mxu0 0.0
        %1930 = vmatpush2.msra.mxu0 0.0
        %1931 = vmatprep.subr.mxu0 0.0
        %1932 = vmatpush2.msra.mxu0 0.0
        %1933 = vmatprep.subr.mxu0 0.0
        %1934 = vmatpush2.msra.mxu0 0.0
        %1935 = vmatprep.subr.mxu0 0.0
        %1936 = vmatpush2.msra.mxu0 0.0
        %1937 = vmatprep.subr.mxu0 0.0
        %1938 = vmatpush2.msra.mxu0 0.0
        %1939 = vmatprep.subr.mxu0 0.0
        %1940 = vmatpush2.msra.mxu0 0.0
        %1941 = vmatprep.subr.mxu0 0.0
        %1942 = vmatpush2.msra.mxu0 0.0
        %1943 = vmatprep.subr.mxu0 0.0
        %1944 = vmatpush2.msra.mxu0 0.0
        %1945 = vmatprep.subr.mxu0 0.0
        %1946 = vmatpush2.msra.mxu0 0.0
        %1947 = vmatprep.subr.mxu0 0.0
        %1948 = vmatpush2.msra.mxu0 0.0
        %1949 = vmatprep.subr.mxu0 0.0
        %1950 = vmatpush2.msra.mxu0 0.0
        %1951 = vmatprep.subr.mxu0 0.0
        %1952 = vmatpush2.msra.mxu0 0.0
        %1953 = vmatprep.subr.mxu0 0.0
        %1954 = vmatpush2.msra.mxu0 0.0
        %1955 = vmatprep.mubr.f32.mxu0 0.0
        %1956 = vmatmul.mubr.f32.gmra.mxu0 %v1889
        %v1957 = vpop.f32.mrf.mxu0
        %v1958 = vadd.f32 %v1886, %v1957
        %v1959 = vpop.f32.mrf.mxu0
        %1960 = vdwg.mxu0
        %v1961 = vmul.f32 %v1958, 0.5
        %v1962 = vmul.f32 %v1958, 0.70710677
        %v1963 = verf.f32.pop %v1962
        %v1964 = vadd.f32 %v1963, 1.0
        %v1965 = vmul.f32 %v1961, %v1964
        %v1966 = vld [vmem:[%s15] sm:$0xff]
        %v1967 = vld [vmem:[%s15 + $0x8] sm:$0xff]
        %v1968 = vld [vmem:[%s15 + $0x10] sm:$0xff]
        %v1969 = vld [vmem:[%s15 + $0x18] sm:$0xff]
        %v1970 = vld [vmem:[%s15 + $0x20] sm:$0xff]
        %v1971 = vld [vmem:[%s15 + $0x28] sm:$0xff]
        %v1972 = vld [vmem:[%s15 + $0x30] sm:$0xff]
        %v1973 = vld [vmem:[%s15 + $0x38] sm:$0xff]
        %v1974 = vld [vmem:[%s16] sm:$0x1]
        %v1976 = vlaneseq
        %v1977 = vshrl.u32 %v1976, 7
        %v1978 = vsub.s32 0, %v1977
        %v1979 = vrot.slane %v1974, %v1978
        %vm1981 = vcmask 523264
        %v1983 = vsel %vm1981, %v1965, 0
        %1985 = vmatprep.subr.mxu0 0.0
        %1986 = vmatpush1.msra.mxu0 0.0
        %1987 = vmatprep.subr.mxu0 0.0
        %1988 = vmatpush1.msra.mxu0 0.0
        %1989 = vmatprep.subr.mxu0 0.0
        %1990 = vmatpush1.msra.mxu0 0.0
        %1991 = vmatprep.subr.mxu0 0.0
        %1992 = vmatpush1.msra.mxu0 0.0
        %1993 = vmatprep.subr.mxu0 0.0
        %1994 = vmatpush1.msra.mxu0 0.0
        %1995 = vmatprep.subr.mxu0 0.0
        %1996 = vmatpush1.msra.mxu0 0.0
        %1997 = vmatprep.subr.mxu0 0.0
        %1998 = vmatpush1.msra.mxu0 0.0
        %1999 = vmatprep.subr.mxu0 0.0
        %2000 = vmatpush1.msra.mxu0 0.0
        %2001 = vmatprep.subr.mxu0 0.0
        %2002 = vmatpush1.msra.mxu0 %v1973
        %2003 = vmatprep.subr.mxu0 0.0
        %2004 = vmatpush1.msra.mxu0 %v1972
        %2005 = vmatprep.subr.mxu0 0.0
        %2006 = vmatpush1.msra.mxu0 %v1971
        %2007 = vmatprep.subr.mxu0 0.0
        %2008 = vmatpush1.msra.mxu0 %v1970
        %2009 = vmatprep.subr.mxu0 0.0
        %2010 = vmatpush1.msra.mxu0 %v1969
        %2011 = vmatprep.subr.mxu0 0.0
        %2012 = vmatpush1.msra.mxu0 %v1968
        %2013 = vmatprep.subr.mxu0 0.0
        %2014 = vmatpush1.msra.mxu0 %v1967
        %2015 = vmatprep.subr.mxu0 0.0
        %2016 = vmatpush1.msra.mxu0 %v1966
        %2017 = vmatprep.subr.mxu0 0.0
        %2018 = vmatpush2.msra.mxu0 0.0
        %2019 = vmatprep.subr.mxu0 0.0
        %2020 = vmatpush2.msra.mxu0 0.0
        %2021 = vmatprep.subr.mxu0 0.0
        %2022 = vmatpush2.msra.mxu0 0.0
        %2023 = vmatprep.subr.mxu0 0.0
        %2024 = vmatpush2.msra.mxu0 0.0
        %2025 = vmatprep.subr.mxu0 0.0
        %2026 = vmatpush2.msra.mxu0 0.0
        %2027 = vmatprep.subr.mxu0 0.0
        %2028 = vmatpush2.msra.mxu0 0.0
        %2029 = vmatprep.subr.mxu0 0.0
        %2030 = vmatpush2.msra.mxu0 0.0
        %2031 = vmatprep.subr.mxu0 0.0
        %2032 = vmatpush2.msra.mxu0 0.0
        %2033 = vmatprep.subr.mxu0 0.0
        %2034 = vmatpush2.msra.mxu0 0.0
        %2035 = vmatprep.subr.mxu0 0.0
        %2036 = vmatpush2.msra.mxu0 0.0
        %2037 = vmatprep.subr.mxu0 0.0
        %2038 = vmatpush2.msra.mxu0 0.0
        %2039 = vmatprep.subr.mxu0 0.0
        %2040 = vmatpush2.msra.mxu0 0.0
        %2041 = vmatprep.subr.mxu0 0.0
        %2042 = vmatpush2.msra.mxu0 0.0
        %2043 = vmatprep.subr.mxu0 0.0
        %2044 = vmatpush2.msra.mxu0 0.0
        %2045 = vmatprep.subr.mxu0 0.0
        %2046 = vmatpush2.msra.mxu0 0.0
        %2047 = vmatprep.subr.mxu0 0.0
        %2048 = vmatpush2.msra.mxu0 0.0
        %2049 = vmatprep.mubr.f32.mxu0 0.0
        %2050 = vmatmul.mubr.f32.gmra.mxu0 %v1983
        %v2051 = vpop.f32.mrf.mxu0
        %v2052 = vadd.f32 %v1979, %v2051
        %v2053 = vpop.f32.mrf.mxu0
        %2054 = vdwg.mxu0
        %v2055 = vadd.f32 %v1847, %v2052
        %2056 = vst.msk [vmem:[%s592] sm:$0xff] %vm596, %v2055
        %s2057 = sand.u32 %s405, 1
        %s2058 = scalar_lea.sflag [#allocation4], %s2057
        %s2059 = sand.u32 %s405, 1
        %s2060 = smul.addr %s2059, 8
        %s2061 = scalar_lea.vmem [#allocation8], %s2060
        // Predicated region
        $region101: #{tpu_custom_call.1} parent=87 // pred_check
          %p2062 = pneg %p415
        $region102: #{tpu_custom_call.1} parent=87 // pred_check_branch
          %2064 = sbr.rel (%p2062) target = $region104
        $region103: #{tpu_custom_call.1} parent=87 // pred_region
          %s2066 = ssub.s32 128, 128
          %2067 = vsyncadd %s2058, %s2066
          %s2068 = smul.addr %s35, 128
          %s2069 = scalar_lea.hbm %s17, %s2068
          %s2071 = sshll.u32 %s2061, 4
          %s2072 = int_to_ptr.vmem [resolvable:$true] %s2071
          %2074 = dma.vmem_to_hbm [thread:$0]  %s2072, 128, %s2069, %s2058
        $region104: #{tpu_custom_call.1} parent=87 // pred_fallthru
          _
      $region88: #{tpu_custom_call.1} parent=5 // pred_fallthru
        _
      %p2075 = scmp.le.s32.totalorder 2, %s30
      // Predicated region
      $region105: #{tpu_custom_call.1} parent=5 // pred_check
        %p2076 = pneg %p2075
      $region106: #{tpu_custom_call.1} parent=5 // pred_check_branch
        %2078 = sbr.rel (%p2076) target = $region108
      $region107: #{tpu_custom_call.1} parent=5 // pred_region
        %s2079 = ssub.s32 %s30, 2
        // Predicated region
        $region109: #{tpu_custom_call.1} parent=107 // pred_check
          %p2080 = pneg %p421
        $region110: #{tpu_custom_call.1} parent=107 // pred_check_branch
          %2082 = sbr.rel (%p2080) target = $region112
        $region111: #{tpu_custom_call.1} parent=107 // pred_region
          %s2083 = sand.u32 %s406, 1
          %s2084 = scalar_lea.sflag [#allocation4], %s2083
          %s2085 = sand.u32 %s406, 1
          %s2086 = smul.addr %s2085, 8
          %s2087 = scalar_lea.vmem [#allocation8], %s2086
          %2088 = dma.done %s2084, 128
        $region112: #{tpu_custom_call.1} parent=107 // pred_fallthru
          _
      $region108: #{tpu_custom_call.1} parent=5 // pred_fallthru
        _
    $region6: #{tpu_custom_call.1} parent=1 // loop_footer
      %s34 = sadd.s32 1, %s30
    $region7: #{tpu_custom_call.1} parent=1 // loop_footer_branch
      %29 = sbr.rel target = $region3
    $region8: #{tpu_custom_call.1} parent=1 // loop_exit
      _
    %2089 = vsyncpa [#allocation3], 1
    %s2090 = scalar_lea.sflag [#allocation3], 1
    %2091 = vsyncpa %s2090, 1
    %2092 = vsyncpa [#allocation6], 1
    %2093 = vsyncpa [#allocation4], 1
    %s2094 = scalar_lea.sflag [#allocation4], 1
    %2095 = vsyncpa %s2094, 1

</llo_original>
